<compile_context>
chip_gen: v7x
topology: tpu7x:2x2x1
jax: 0.10.0
libtpu: 0.0.40
codegen_flags: <defaults>
</compile_context>

<pallas_src>
import jax
import jax.numpy as jnp
from jax import lax
from jax.experimental import pallas as pl
from jax.experimental.pallas import tpu as pltpu


# ------------------------- Pallas kernels -------------------------

def _gram_kernel(x_ref, w1_ref, gram_ref, sum_ref):
    """gx = conv1_w @ x_tile (bias dropped; it cancels); accumulate gx gx^T + sums.

    x_ref: (C, tm) pixel slab (pixels on lanes).  Outputs are per-(batch,
    parallel-split) accumulators (same block across the pixel-tile axis).
    """
    t = pl.program_id(2)

    @pl.when(t == 0)
    def _():
        gram_ref[...] = jnp.zeros_like(gram_ref)
        sum_ref[...] = jnp.zeros_like(sum_ref)

    gx = jnp.dot(w1_ref[...], x_ref[...],
                 preferred_element_type=jnp.float32)                 # (C, tm)
    # Contract the (lane) pixel axis of both operands -> (C, C) Gram block.
    gram_ref[...] += lax.dot_general(
        gx, gx, dimension_numbers=(((1,), (1,)), ((), ())),
        preferred_element_type=jnp.float32)
    sum_ref[...] += jnp.sum(gx, axis=1, keepdims=True)               # (C, 1)


def _tail_kernel(x_ref, m_ref, bias_ref, o_ref):
    """out = x + M_b @ x + bias_b.

    M_b / bias_b fold conv1, mean-centering, the eigen projection and conv2;
    the residual add is fused here too.  x/out tiles are lane-dense (C, tm).
    """
    x = x_ref[...]
    # Kept f32: att feeds a 2e-3-tolerance check; bf16 here is a v6e/v7x
    # option to validate separately (never on the Gram path, which feeds eigh).
    att = jnp.dot(m_ref[...], x, preferred_element_type=jnp.float32)
    o_ref[...] = (x + att + bias_ref[...]).astype(o_ref.dtype)


# ------------------------- tile planning -------------------------

def _vmem_capacity_bytes():
    try:
        return int(pltpu.get_tpu_info().vmem_capacity_bytes)
    except Exception:
        return 64 << 20            # conservative fallback (v7x physical VMEM)


def _plan_tiles(hw, c, itemsize=4):
    """Pick (hw_eff, tm, n_t): lane-dim pixel-tile width tm.

    Budgets against everything the pipeline double-buffers in the worse of the
    two kernels (kernel 2: x tile + out tile, plus the per-batch M/bias
    blocks).  hw_eff >= hw; if hw_eff > hw the caller zero-pads (exact for the
    Gram pass, padded outputs are sliced off).
    """
    cap = _vmem_capacity_bytes()
    budget = cap // 4                                # headroom for compiler temps
    fixed = 2 * 2 * (c * c + c) * itemsize           # double-buffered M + bias
    per_px = 2 * 2 * c * itemsize                    # x tile + out tile, 2-deep
    tm_max = max(128, ((budget - fixed) // per_px) // 128 * 128)

    if hw % 128 == 0:
        # Largest divisor of hw that is a multiple of 128 and fits the budget.
        for nb in range(1, hw // 128 + 1):
            if hw % nb == 0 and (hw // nb) % 128 == 0 and (hw // nb) <= tm_max:
                tm = hw // nb
                return hw, tm, hw // tm
        return hw, 128, hw // 128
    if hw <= tm_max:
        return hw, hw, 1                             # full-extent lane block
    tm = tm_max
    hw_eff = pl.cdiv(hw, tm) * tm
    return hw_eff, tm, hw_eff // tm


# ------------------------- wrapper -------------------------

def sapca_block_forward(x_nchw, p):
    dt = jnp.float32
    B, C, H, W = x_nchw.shape
    C4 = C // 4
    HW = H * W
    hp = lax.Precision.HIGHEST

    # Channels-first flat view: (B, C, HW) is a reshape of NCHW (no transpose,
    # no extra HBM round trip); the pixel axis rides the 128-wide lane dim.
    x_flat = x_nchw.reshape(B, C, HW).astype(dt)

    hw_eff, tm, n_t = _plan_tiles(HW, C)
    if hw_eff != HW:
        # Zeros contribute nothing to the Gram/sums; padded outputs sliced off.
        x_flat = jnp.pad(x_flat, ((0, 0), (0, 0), (0, hw_eff - HW)))

    # Extra parallel split so both v7x TensorCores are fed even at B == 1.
    n_par = 2 if (n_t >= 2 and n_t % 2 == 0) else 1
    ntp = n_t // n_par

    vmem_cap = _vmem_capacity_bytes()
    cparams1 = pltpu.CompilerParams(
        dimension_semantics=("parallel", "parallel", "arbitrary"),
        vmem_limit_bytes=vmem_cap // 2)
    cparams2 = pltpu.CompilerParams(
        dimension_semantics=("parallel", "parallel"),
        vmem_limit_bytes=vmem_cap // 2)

    w1 = p['conv1_w'].astype(dt)                         # (C_out, C_in) = (C, C)

    # ---- stage 1: conv1 (no bias) + per-batch Gram matrix / channel sums ----
    gram_p, sums_p = pl.pallas_call(
        _gram_kernel,
        out_shape=(jax.ShapeDtypeStruct((B, n_par, C, C), jnp.float32),
                   jax.ShapeDtypeStruct((B, n_par, C, 1), jnp.float32)),
        grid_spec=pltpu.PrefetchScalarGridSpec(
            num_scalar_prefetch=0,
            grid=(B, n_par, ntp),
            in_specs=[pl.BlockSpec((None, C, tm),
                                   lambda b, s, t: (b, 0, s * ntp + t)),
                      pl.BlockSpec((C, C), lambda b, s, t: (0, 0))],
            out_specs=(pl.BlockSpec((None, None, C, C),
                                    lambda b, s, t: (b, s, 0, 0)),
                       pl.BlockSpec((None, None, C, 1),
                                    lambda b, s, t: (b, s, 0, 0)))),
        compiler_params=cparams1,
    )(x_flat, w1)

    gram = jnp.sum(gram_p, axis=1)                       # (B, C, C)
    sums = jnp.sum(sums_p, axis=1)[..., 0]               # (B, C)

    # ---- glue: covariance + eigendecomposition on the tiny (B, C, C) ----
    mean0 = sums / HW                                    # true HW (not padded)
    cmat = (gram - sums[:, :, None] * sums[:, None, :] / HW) / B
    # TODO(synk): torch.symeig has no Pallas equivalent; jnp.linalg.eigh on the
    # tiny (B, C, C) matrix (ascending eigenvalues, same convention as symeig).
    _, eigvec = jnp.linalg.eigh(cmat)
    wT = eigvec[:, :, -C4:]                              # (B, C, C4)

    # ---- fold conv1 / centering / eig-projection / conv2 into one matmul ----
    # conv1_b cancels exactly out of the centered activation, so it never
    # appears anywhere in the folded matrices.
    w2 = p['conv2_w'].astype(dt)                         # (C, C4)
    b2 = p['conv2_b'].astype(dt)                         # (C,)
    proj = jnp.einsum('oq,bcq->boc', w2, wT, precision=hp)       # w2 @ w_b
    m_comb = jnp.einsum('boc,ci->boi', proj, w1, precision=hp)   # w2 w_b w1
    bias = (b2[None, :]
            - jnp.einsum('boc,bc->bo', proj, mean0, precision=hp))[:, :, None]

    # ---- stage 2: out = x + M_b @ x + bias_b (lane-dense store) ----
    out_flat = pl.pallas_call(
        _tail_kernel,
        out_shape=jax.ShapeDtypeStruct((B, C, hw_eff), dt),
        grid_spec=pltpu.PrefetchScalarGridSpec(
            num_scalar_prefetch=0,
            grid=(B, n_t),
            in_specs=[pl.BlockSpec((None, C, tm), lambda b, t: (b, 0, t)),
                      pl.BlockSpec((None, C, C), lambda b, t: (b, 0, 0)),
                      pl.BlockSpec((None, C, 1), lambda b, t: (b, 0, 0))],
            out_specs=pl.BlockSpec((None, C, tm), lambda b, t: (b, 0, t))),
        compiler_params=cparams2,
    )(x_flat, m_comb, bias)

    if hw_eff != HW:
        out_flat = out_flat[:, :, :HW]
    return out_flat.reshape(B, C, H, W)


# ------------------------- pure-JAX reference -------------------------

def sapca_block_reference(x, p):
    hp = lax.Precision.HIGHEST
    B, C, H, W = x.shape
    C4 = C // 4

    gx = (jnp.einsum('bchw,oc->bohw', x, p['conv1_w'], precision=hp)
          + p['conv1_b'][None, :, None, None])
    gx_ = gx.reshape(B, C, H * W)
    gx_ = gx_ - jnp.mean(gx_, axis=-1, keepdims=True)
    cmat = jnp.matmul(gx_, jnp.transpose(gx_, (0, 2, 1)), precision=hp) / B
    _, eigvec = jnp.linalg.eigh(cmat)                  # ascending, like symeig
    w = jnp.transpose(eigvec[:, :, -C4:], (0, 2, 1))   # (B, C4, C)
    y = jnp.matmul(w, gx_, precision=hp).reshape(B, C4, H, W)
    att = (jnp.einsum('bchw,oc->bohw', y, p['conv2_w'], precision=hp)
           + p['conv2_b'][None, :, None, None])
    return x + att


# ------------------------- parameter init -------------------------

def init_params(key, in_channels):
    C = in_channels
    C4 = C // 4
    ks = jax.random.split(key, 4)
    return {
        'conv1_w': 0.2 * jax.random.normal(ks[0], (C, C), jnp.float32),
        'conv1_b': 0.1 * jax.random.normal(ks[1], (C,), jnp.float32),
        'conv2_w': 0.2 * jax.random.normal(ks[2], (C, C4), jnp.float32),
        'conv2_b': 0.1 * jax.random.normal(ks[3], (C,), jnp.float32),
    }


# ------------------------- main -------------------------

if __name__ == "__main__":
    key = jax.random.PRNGKey(0)
    k_x, k_p = jax.random.split(key)

    B, C, H, W = 2, 16, 16, 16          # in_channels=16 -> C//4 = 4
    x = jax.random.normal(k_x, (B, C, H, W), jnp.float32)
    params = init_params(k_p, C)

    fwd = jax.jit(sapca_block_forward)
    out = jax.block_until_ready(fwd(x, params))
    assert out.shape == (B, C, H, W), out.shape

    ref = sapca_block_reference(x, params)
    max_err = float(jnp.max(jnp.abs(out - ref)))
    if not jnp.allclose(out, ref, rtol=2e-3, atol=2e-3):
        raise AssertionError(f"Pallas output mismatch vs reference, max_err={max_err}")

    print("KERNEL_OK")
</pallas_src>

<mosaic_0001>
module attributes {stable_mosaic.version = 11 : i64} {
  func.func @_gram_kernel(%arg0: i32, %arg1: i32, %arg2: i32, %arg3: memref<1x16x256xf32, #tpu.memory_space<vmem>>, %arg4: memref<16x16xf32, #tpu.memory_space<vmem>>, %arg5: memref<1x1x16x16xf32, #tpu.memory_space<vmem>>, %arg6: memref<1x1x16x1xf32, #tpu.memory_space<vmem>>) attributes {dimension_semantics = [#tpu.dimension_semantics<parallel>, #tpu.dimension_semantics<parallel>, #tpu.dimension_semantics<arbitrary>], iteration_bounds = array<i64: 2, 1, 1>, scalar_prefetch = 0 : i64, scratch_operands = 0 : i64, tpu.core_type = #tpu.core_type<tc>, window_params = [{transform_indices = @transform_0, window_bounds = array<i64: 1, 16, 256>}, {pipeline_mode = #tpu.pipeline_mode<synchronous>, transform_indices = @transform_1, window_bounds = array<i64: 16, 16>}, {transform_indices = @transform_2, window_bounds = array<i64: 1, 1, 16, 16>}, {transform_indices = @transform_3, window_bounds = array<i64: 1, 1, 16, 1>}]} {
    %c0_i32 = arith.constant 0 : i32
    %0 = arith.cmpi eq, %arg2, %c0_i32 : i32
    %1 = arith.extui %0 : i1 to i32
    %c0_i32_0 = arith.constant 0 : i32
    %2 = arith.cmpi ne, %1, %c0_i32_0 : i32
    scf.if %2 {
      %cst_23 = arith.constant 0.000000e+00 : f32
      %22 = vector.broadcast %cst_23 : f32 to vector<16x16xf32>
      %c0_24 = arith.constant 0 : index
      %c0_25 = arith.constant 0 : index
      %c0_26 = arith.constant 0 : index
      %c0_27 = arith.constant 0 : index
      %23 = vector.load %arg5[%c0_24, %c0_25, %c0_26, %c0_27] : memref<1x1x16x16xf32, #tpu.memory_space<vmem>>, vector<1x1x16x16xf32>
      %24 = vector.shape_cast %23 : vector<1x1x16x16xf32> to vector<16x16xf32>
      %25 = vector.shape_cast %22 : vector<16x16xf32> to vector<1x1x16x16xf32>
      tpu.vector_store %arg5[%c0_24, %c0_25, %c0_26, %c0_27], %25 {strides = array<i32>} : memref<1x1x16x16xf32, #tpu.memory_space<vmem>>, vector<1x1x16x16xf32>,
      %cst_28 = arith.constant 0.000000e+00 : f32
      %26 = vector.broadcast %cst_28 : f32 to vector<16x1xf32>
      %c0_29 = arith.constant 0 : index
      %c0_30 = arith.constant 0 : index
      %c0_31 = arith.constant 0 : index
      %c0_32 = arith.constant 0 : index
      %27 = vector.load %arg6[%c0_29, %c0_30, %c0_31, %c0_32] : memref<1x1x16x1xf32, #tpu.memory_space<vmem>>, vector<1x1x16x1xf32>
      %28 = vector.shape_cast %27 : vector<1x1x16x1xf32> to vector<16x1xf32>
      %29 = vector.shape_cast %26 : vector<16x1xf32> to vector<1x1x16x1xf32>
      tpu.vector_store %arg6[%c0_29, %c0_30, %c0_31, %c0_32], %29 {strides = array<i32>} : memref<1x1x16x1xf32, #tpu.memory_space<vmem>>, vector<1x1x16x1xf32>,
    } else {
    }
    %c0 = arith.constant 0 : index
    %c0_1 = arith.constant 0 : index
    %3 = vector.load %arg4[%c0, %c0_1] : memref<16x16xf32, #tpu.memory_space<vmem>>, vector<16x16xf32>
    %c0_2 = arith.constant 0 : index
    %c0_3 = arith.constant 0 : index
    %c0_4 = arith.constant 0 : index
    %4 = vector.load %arg3[%c0_2, %c0_3, %c0_4] : memref<1x16x256xf32, #tpu.memory_space<vmem>>, vector<1x16x256xf32>
    %5 = vector.shape_cast %4 : vector<1x16x256xf32> to vector<16x256xf32>
    %cst = arith.constant dense<0.000000e+00> : vector<16x256xf32>
    %6 = tpu.matmul %3, %5, %cst {dimension_numbers = #tpu.dot_dimension_numbers<[1], [0], [0], [1], [0, 0, 1, 1], [], []>} : vector<16x16xf32>, vector<16x256xf32>, vector<16x256xf32> -> vector<16x256xf32>
    %c0_5 = arith.constant 0 : index
    %c0_6 = arith.constant 0 : index
    %c0_7 = arith.constant 0 : index
    %c0_8 = arith.constant 0 : index
    %7 = vector.load %arg5[%c0_5, %c0_6, %c0_7, %c0_8] : memref<1x1x16x16xf32, #tpu.memory_space<vmem>>, vector<1x1x16x16xf32>
    %8 = vector.shape_cast %7 : vector<1x1x16x16xf32> to vector<16x16xf32>
    %cst_9 = arith.constant dense<0.000000e+00> : vector<16x16xf32>
    %9 = tpu.matmul %6, %6, %cst_9 {dimension_numbers = #tpu.dot_dimension_numbers<[1], [1], [0], [0], [0, 0, 1, 0], [], []>} : vector<16x256xf32>, vector<16x256xf32>, vector<16x16xf32> -> vector<16x16xf32>
    %10 = arith.addf %8, %9 : vector<16x16xf32>
    %c0_10 = arith.constant 0 : index
    %c0_11 = arith.constant 0 : index
    %c0_12 = arith.constant 0 : index
    %c0_13 = arith.constant 0 : index
    %11 = vector.load %arg5[%c0_10, %c0_11, %c0_12, %c0_13] : memref<1x1x16x16xf32, #tpu.memory_space<vmem>>, vector<1x1x16x16xf32>
    %12 = vector.shape_cast %11 : vector<1x1x16x16xf32> to vector<16x16xf32>
    %13 = vector.shape_cast %10 : vector<16x16xf32> to vector<1x1x16x16xf32>
    tpu.vector_store %arg5[%c0_10, %c0_11, %c0_12, %c0_13], %13 {strides = array<i32>} : memref<1x1x16x16xf32, #tpu.memory_space<vmem>>, vector<1x1x16x16xf32>,
    %c0_14 = arith.constant 0 : index
    %c0_15 = arith.constant 0 : index
    %c0_16 = arith.constant 0 : index
    %c0_17 = arith.constant 0 : index
    %14 = vector.load %arg6[%c0_14, %c0_15, %c0_16, %c0_17] : memref<1x1x16x1xf32, #tpu.memory_space<vmem>>, vector<1x1x16x1xf32>
    %15 = vector.shape_cast %14 : vector<1x1x16x1xf32> to vector<16x1xf32>
    %cst_18 = arith.constant dense<0.000000e+00> : vector<16xf32>
    %16 = vector.multi_reduction <add>, %6, %cst_18 [1] : vector<16x256xf32> to vector<16xf32>
    %17 = vector.shape_cast %16 : vector<16xf32> to vector<16x1xf32>
    %18 = arith.addf %15, %17 : vector<16x1xf32>
    %c0_19 = arith.constant 0 : index
    %c0_20 = arith.constant 0 : index
    %c0_21 = arith.constant 0 : index
    %c0_22 = arith.constant 0 : index
    %19 = vector.load %arg6[%c0_19, %c0_20, %c0_21, %c0_22] : memref<1x1x16x1xf32, #tpu.memory_space<vmem>>, vector<1x1x16x1xf32>
    %20 = vector.shape_cast %19 : vector<1x1x16x1xf32> to vector<16x1xf32>
    %21 = vector.shape_cast %18 : vector<16x1xf32> to vector<1x1x16x1xf32>
    tpu.vector_store %arg6[%c0_19, %c0_20, %c0_21, %c0_22], %21 {strides = array<i32>} : memref<1x1x16x1xf32, #tpu.memory_space<vmem>>, vector<1x1x16x1xf32>,
    return
  }
  func.func @transform_0(%arg0: i32, %arg1: i32, %arg2: i32) -> (i32, i32, i32) {
    %c1_i32 = arith.constant 1 : i32
    %0 = arith.muli %arg1, %c1_i32 : i32
    %1 = arith.addi %0, %arg2 : i32
    %c0_i32 = arith.constant 0 : i32
    %c0_i32_0 = arith.constant 0 : i32
    return %arg0, %c0_i32, %1 : i32, i32, i32
  }
  func.func @transform_1(%arg0: i32, %arg1: i32, %arg2: i32) -> (i32, i32) {
    %c0_i32 = arith.constant 0 : i32
    %c0_i32_0 = arith.constant 0 : i32
    %c0_i32_1 = arith.constant 0 : i32
    return %c0_i32, %c0_i32_0 : i32, i32
  }
  func.func @transform_2(%arg0: i32, %arg1: i32, %arg2: i32) -> (i32, i32, i32, i32) {
    %c0_i32 = arith.constant 0 : i32
    %c0_i32_0 = arith.constant 0 : i32
    %c0_i32_1 = arith.constant 0 : i32
    return %arg0, %arg1, %c0_i32, %c0_i32_0 : i32, i32, i32, i32
  }
  func.func @transform_3(%arg0: i32, %arg1: i32, %arg2: i32) -> (i32, i32, i32, i32) {
    %c0_i32 = arith.constant 0 : i32
    %c0_i32_0 = arith.constant 0 : i32
    %c0_i32_1 = arith.constant 0 : i32
    return %arg0, %arg1, %c0_i32, %c0_i32_0 : i32, i32, i32, i32
  }
}

module attributes {stable_mosaic.version = 11 : i64} {
  func.func @_tail_kernel(%arg0: i32, %arg1: i32, %arg2: memref<1x16x256xf32, #tpu.memory_space<vmem>>, %arg3: memref<1x16x16xf32, #tpu.memory_space<vmem>>, %arg4: memref<1x16x1xf32, #tpu.memory_space<vmem>>, %arg5: memref<1x16x256xf32, #tpu.memory_space<vmem>>) attributes {dimension_semantics = [#tpu.dimension_semantics<parallel>, #tpu.dimension_semantics<parallel>], iteration_bounds = array<i64: 2, 1>, scalar_prefetch = 0 : i64, scratch_operands = 0 : i64, tpu.core_type = #tpu.core_type<tc>, window_params = [{transform_indices = @transform_0, window_bounds = array<i64: 1, 16, 256>}, {transform_indices = @transform_1, window_bounds = array<i64: 1, 16, 16>}, {transform_indices = @transform_2, window_bounds = array<i64: 1, 16, 1>}, {transform_indices = @transform_3, window_bounds = array<i64: 1, 16, 256>}]} {
    %c0 = arith.constant 0 : index
    %c0_0 = arith.constant 0 : index
    %c0_1 = arith.constant 0 : index
    %0 = vector.load %arg2[%c0, %c0_0, %c0_1] : memref<1x16x256xf32, #tpu.memory_space<vmem>>, vector<1x16x256xf32>
    %1 = vector.shape_cast %0 : vector<1x16x256xf32> to vector<16x256xf32>
    %c0_2 = arith.constant 0 : index
    %c0_3 = arith.constant 0 : index
    %c0_4 = arith.constant 0 : index
    %2 = vector.load %arg3[%c0_2, %c0_3, %c0_4] : memref<1x16x16xf32, #tpu.memory_space<vmem>>, vector<1x16x16xf32>
    %3 = vector.shape_cast %2 : vector<1x16x16xf32> to vector<16x16xf32>
    %cst = arith.constant dense<0.000000e+00> : vector<16x256xf32>
    %4 = tpu.matmul %3, %1, %cst {dimension_numbers = #tpu.dot_dimension_numbers<[1], [0], [0], [1], [0, 0, 1, 1], [], []>} : vector<16x16xf32>, vector<16x256xf32>, vector<16x256xf32> -> vector<16x256xf32>
    %5 = arith.addf %1, %4 : vector<16x256xf32>
    %c0_5 = arith.constant 0 : index
    %c0_6 = arith.constant 0 : index
    %c0_7 = arith.constant 0 : index
    %6 = vector.load %arg4[%c0_5, %c0_6, %c0_7] : memref<1x16x1xf32, #tpu.memory_space<vmem>>, vector<1x16x1xf32>
    %7 = vector.shape_cast %6 : vector<1x16x1xf32> to vector<16x1xf32>
    %8 = vector.broadcast %7 : vector<16x1xf32> to vector<16x256xf32>
    %9 = arith.addf %5, %8 : vector<16x256xf32>
    %c0_8 = arith.constant 0 : index
    %c0_9 = arith.constant 0 : index
    %c0_10 = arith.constant 0 : index
    %10 = vector.load %arg5[%c0_8, %c0_9, %c0_10] : memref<1x16x256xf32, #tpu.memory_space<vmem>>, vector<1x16x256xf32>
    %11 = vector.shape_cast %10 : vector<1x16x256xf32> to vector<16x256xf32>
    %12 = vector.shape_cast %9 : vector<16x256xf32> to vector<1x16x256xf32>
    tpu.vector_store %arg5[%c0_8, %c0_9, %c0_10], %12 {strides = array<i32>} : memref<1x16x256xf32, #tpu.memory_space<vmem>>, vector<1x16x256xf32>,
    return
  }
  func.func @transform_0(%arg0: i32, %arg1: i32) -> (i32, i32, i32) {
    %c0_i32 = arith.constant 0 : i32
    %c0_i32_0 = arith.constant 0 : i32
    return %arg0, %c0_i32, %arg1 : i32, i32, i32
  }
  func.func @transform_1(%arg0: i32, %arg1: i32) -> (i32, i32, i32) {
    %c0_i32 = arith.constant 0 : i32
    %c0_i32_0 = arith.constant 0 : i32
    %c0_i32_1 = arith.constant 0 : i32
    return %arg0, %c0_i32, %c0_i32_0 : i32, i32, i32
  }
  func.func @transform_2(%arg0: i32, %arg1: i32) -> (i32, i32, i32) {
    %c0_i32 = arith.constant 0 : i32
    %c0_i32_0 = arith.constant 0 : i32
    %c0_i32_1 = arith.constant 0 : i32
    return %arg0, %c0_i32, %c0_i32_0 : i32, i32, i32
  }
  func.func @transform_3(%arg0: i32, %arg1: i32) -> (i32, i32, i32) {
    %c0_i32 = arith.constant 0 : i32
    %c0_i32_0 = arith.constant 0 : i32
    return %arg0, %c0_i32, %arg1 : i32, i32, i32
  }
}

</mosaic_0001>

<llo_original>
// kernel: custom-call.2
$region0: #{custom-call.2}
  %s0 = inlined_call_operand.vmem [shape: f32[2,8,8], index: 0, kind: input, shape index: {}]
  %s1 = inlined_call_operand.vmem [shape: f32[2,8,8], index: 1, kind: input, shape index: {}]
  %s2 = inlined_call_operand.vmem [shape: f32[2,8,8], index: 2, kind: input, shape index: {}]
  %s3 = inlined_call_operand.vmem [shape: f32[2,8,8], index: 3, kind: input, shape index: {}]
  %s4 = inlined_call_operand.vmem [shape: f32[2,8], index: 4, kind: output, shape index: {0}]
  %s5 = inlined_call_operand.vmem [shape: f32[2,8], index: 5, kind: output, shape index: {1}]
  %s6 = inlined_call_operand.vmem [shape: f32[2,8,8], index: 6, kind: output, shape index: {2}]
  %s7 = inlined_call_operand.vmem [shape: f32[2,8,8], index: 7, kind: output, shape index: {3}]
  %s8 = inlined_call_operand.vmem [shape: f32[2,8,8], index: 8, kind: output, shape index: {4}]
  %s9 = inlined_call_operand.vmem [shape: f32[2,8,8], index: 9, kind: output, shape index: {5}]
  %10 = xla_tuple %s4, %s5, %s6, %s7, %s8, %s9
  $region1: #{custom-call.2} parent=0
    #allocation0 [shape = 'u8[8192]{0}', space=vmem, size = 0x2000, scoped, tag = 'operand span for operand 0']
    #allocation1 [shape = 'u8[8192]{0}', space=vmem, size = 0x2000, scoped, tag = 'operand span for operand 1']
    #allocation2 [shape = 'u8[8192]{0}', space=vmem, size = 0x2000, scoped, tag = 'operand span for operand 2']
    #allocation3 [shape = 'u8[8192]{0}', space=vmem, size = 0x2000, scoped, tag = 'operand span for operand 3']
    #allocation4 [shape = 'u8[4096]{0}', space=vmem, size = 0x1000, scoped, tag = 'operand span for operand 4']
    #allocation5 [shape = 'u8[2048]{0}', space=vmem, size = 0x800, scoped, tag = 'packed  for operand 4']
    #allocation6 [shape = 'u8[4096]{0}', space=vmem, size = 0x1000, scoped, tag = 'operand span for operand 5']
    #allocation7 [shape = 'u8[2048]{0}', space=vmem, size = 0x800, scoped, tag = 'packed  for operand 5']
    #allocation8 [shape = 'u8[8192]{0}', space=vmem, size = 0x2000, scoped, tag = 'operand span for operand 6']
    #allocation9 [shape = 'u8[8192]{0}', space=vmem, size = 0x2000, scoped, tag = 'operand span for operand 7']
    #allocation10 [shape = 'u8[8192]{0}', space=vmem, size = 0x2000, scoped, tag = 'operand span for operand 8']
    #allocation11 [shape = 'u8[8192]{0}', space=vmem, size = 0x2000, scoped, tag = 'operand span for operand 9']
    loop: start=0, step=1, limit=4
    $region2: #{custom-call.2} parent=1 // loop_pre_header
      _
    $region3: #{custom-call.2} parent=1 // loop_header
      %s12 = sphi 0, %s16
      %p13 = scmp.ge.s32.totalorder %s12, 4
      %s24 = sphi 0, %s26
      %s27 = sphi 0, %s24
      %s28 = sphi 0, %s27
      %s44 = sphi 0, %s28
      %s52 = sphi 0, %s54
      %s55 = sphi 0, %s52
      %s56 = sphi 0, %s55
      %s72 = sphi 0, %s56
    $region4: #{custom-call.2} parent=1 // loop_header_branch
      %15 = sbr.rel (%p13) target = $region8
    $region5: #{custom-call.2} parent=1 // loop_body
      %s17 = ssub.s32 %s12, 1
      %s18 = ssub.s32 %s12, 2
      %s19 = sadd.s32 %s12, 1
      %s20 = sshrl.u32 %s12, 3
      %s21 = sshrl.u32 %s19, 3
      %s22 = ssub.s32 %s20, %s21
      %p23 = scmp.eq.s32.totalorder %s22, 0
      %s25 = sadd.s32 %s24, 1
      %s26 = scalar_select %p23, %s24, %s25
      %p29 = pneg %p23
      %p30 = scmp.eq.s32.totalorder %s12, 1
      %p31 = por %p29, %p30
      %p32 = scmp.ne.s32.totalorder %s24, %s27
      %p33 = scmp.eq.s32.totalorder %s12, 0
      %p34 = por %p32, %p33
      %p35 = scmp.ne.s32.totalorder %s24, %s27
      %p36 = scmp.eq.s32.totalorder %s17, 1
      %p37 = por %p35, %p36
      %p38 = scmp.ne.s32.totalorder %s27, %s28
      %p39 = scmp.eq.s32.totalorder %s17, 0
      %p40 = por %p38, %p39
      %p41 = scmp.ne.s32.totalorder %s27, %s28
      %p42 = scmp.eq.s32.totalorder %s18, 1
      %p43 = por %p41, %p42
      %p45 = scmp.ne.s32.totalorder %s28, %s44
      %p46 = scmp.eq.s32.totalorder %s18, 0
      %p47 = por %p45, %p46
      %s48 = sshrl.u32 %s12, 3
      %s49 = sshrl.u32 %s19, 3
      %s50 = ssub.s32 %s48, %s49
      %p51 = scmp.eq.s32.totalorder %s50, 0
      %s53 = sadd.s32 %s52, 1
      %s54 = scalar_select %p51, %s52, %s53
      %p57 = pneg %p51
      %p58 = scmp.eq.s32.totalorder %s12, 1
      %p59 = por %p57, %p58
      %p60 = scmp.ne.s32.totalorder %s52, %s55
      %p61 = scmp.eq.s32.totalorder %s12, 0
      %p62 = por %p60, %p61
      %p63 = scmp.ne.s32.totalorder %s52, %s55
      %p64 = scmp.eq.s32.totalorder %s17, 1
      %p65 = por %p63, %p64
      %p66 = scmp.ne.s32.totalorder %s55, %s56
      %p67 = scmp.eq.s32.totalorder %s17, 0
      %p68 = por %p66, %p67
      %p69 = scmp.ne.s32.totalorder %s55, %s56
      %p70 = scmp.eq.s32.totalorder %s18, 1
      %p71 = por %p69, %p70
      %p73 = scmp.ne.s32.totalorder %s56, %s72
      %p74 = scmp.eq.s32.totalorder %s18, 0
      %p75 = por %p73, %p74
      %p76 = scmp.le.s32.totalorder 1, %s12
      %p77 = scmp.lt.s32.totalorder %s12, 3
      %p78 = pnand %p76, %p77
      %p79 = pneg %p78
      // Predicated region
      $region9: #{custom-call.2} parent=5 // pred_check
        _
      $region10: #{custom-call.2} parent=5 // pred_check_branch
        %81 = sbr.rel (%p78) target = $region12
      $region11: #{custom-call.2} parent=5 // pred_region
        %s82 = ssub.s32 %s12, 1
      $region12: #{custom-call.2} parent=5 // pred_fallthru
        _
      %p83 = scmp.lt.s32.totalorder %s12, 2
      // Predicated region
      $region13: #{custom-call.2} parent=5 // pred_check
        %p84 = pneg %p83
      $region14: #{custom-call.2} parent=5 // pred_check_branch
        %86 = sbr.rel (%p84) target = $region16
      $region15: #{custom-call.2} parent=5 // pred_region
        %s87 = sand.u32 %s12, 1
        %s88 = sand.u32 %s12, 1
        %s89 = smul.addr %s88, 8
        %s90 = scalar_lea.vmem [#allocation0], %s89
        %s91 = smul.addr %s12, 8
        %s92 = scalar_lea.vmem %s0, %s91
        // Predicated region
        $region17: #{custom-call.2} parent=15 // pred_check
          _
        $region18: #{custom-call.2} parent=15 // pred_check_branch
          %94 = sbr.rel (0) target = $region20
        $region19: #{custom-call.2} parent=15 // pred_region
          // Predicated region
          $region21: #{custom-call.2} parent=19 // pred_check
            _
          $region22: #{custom-call.2} parent=19 // pred_check_branch
            %96 = sbr.rel (0) target = $region24
          $region23: #{custom-call.2} parent=19 // pred_region
            // Predicated region
            $region36: #{custom-call.2} parent=23 // pred_check
              _
            $region37: #{custom-call.2} parent=23 // pred_check_branch
              %111 = sbr.rel (0) target = $region39
            $region38: #{custom-call.2} parent=23 // pred_region
              loop: start=0, step=1, limit=1
              $region40: #{custom-call.2} parent=38 // loop_pre_header
                _
              $region41: #{custom-call.2} parent=38 // loop_header
                %s113 = sphi 0, %s117
                %p114 = scmp.ge.s32.totalorder %s113, 1
                %s118 = sphi %s92, %s92
                %s119 = sphi %s90, %s90
              $region42: #{custom-call.2} parent=38 // loop_header_branch
                %116 = sbr.rel (%p114) target = $region46
              $region43: #{custom-call.2} parent=38 // loop_body
                %v120 = vld [vmem:[%s118] sm:$0xff]
                %121 = vst [vmem:[%s119] sm:$0xff] %v120
              $region44: #{custom-call.2} parent=38 // loop_footer
                %s117 = sadd.s32 1, %s113
              $region45: #{custom-call.2} parent=38 // loop_footer_branch
                %112 = sbr.rel target = $region41
              $region46: #{custom-call.2} parent=38 // loop_exit
                _
            $region39: #{custom-call.2} parent=23 // pred_fallthru
              _
            // Predicated region
            $region47: #{custom-call.2} parent=23 // pred_check
              _
            $region48: #{custom-call.2} parent=23 // pred_check_branch
              %123 = sbr.rel target = $region50
            $region49: #{custom-call.2} parent=23 // pred_region
              _
            $region50: #{custom-call.2} parent=23 // pred_fallthru
              _
          $region24: #{custom-call.2} parent=19 // pred_fallthru
            _
          // Predicated region
          $region25: #{custom-call.2} parent=19 // pred_check
            _
          $region26: #{custom-call.2} parent=19 // pred_check_branch
            %98 = sbr.rel target = $region28
          $region27: #{custom-call.2} parent=19 // pred_region
            loop: start=0, step=1, limit=1
            $region29: #{custom-call.2} parent=27 // loop_pre_header
              _
            $region30: #{custom-call.2} parent=27 // loop_header
              %s101 = sphi 0, %s105
              %p102 = scmp.ge.s32.totalorder %s101, 1
              %s106 = sphi %s92, %s92
              %s107 = sphi %s90, %s90
            $region31: #{custom-call.2} parent=27 // loop_header_branch
              %104 = sbr.rel (%p102) target = $region35
            $region32: #{custom-call.2} parent=27 // loop_body
              %v108 = vld [vmem:[%s106] sm:$0xff]
              %109 = vst [vmem:[%s107] sm:$0xff] %v108
            $region33: #{custom-call.2} parent=27 // loop_footer
              %s105 = sadd.s32 1, %s101
            $region34: #{custom-call.2} parent=27 // loop_footer_branch
              %100 = sbr.rel target = $region30
            $region35: #{custom-call.2} parent=27 // loop_exit
              _
          $region28: #{custom-call.2} parent=19 // pred_fallthru
            _
        $region20: #{custom-call.2} parent=15 // pred_fallthru
          _
        %124 = vnop
        %s125 = sand.u32 %s12, 1
        %s126 = sand.u32 %s12, 1
        %s127 = smul.addr %s126, 8
        %s128 = scalar_lea.vmem [#allocation1], %s127
        %s129 = smul.addr %s12, 8
        %s130 = scalar_lea.vmem %s1, %s129
        // Predicated region
        $region51: #{custom-call.2} parent=15 // pred_check
          _
        $region52: #{custom-call.2} parent=15 // pred_check_branch
          %132 = sbr.rel (0) target = $region54
        $region53: #{custom-call.2} parent=15 // pred_region
          // Predicated region
          $region55: #{custom-call.2} parent=53 // pred_check
            _
          $region56: #{custom-call.2} parent=53 // pred_check_branch
            %134 = sbr.rel (0) target = $region58
          $region57: #{custom-call.2} parent=53 // pred_region
            // Predicated region
            $region70: #{custom-call.2} parent=57 // pred_check
              _
            $region71: #{custom-call.2} parent=57 // pred_check_branch
              %149 = sbr.rel (0) target = $region73
            $region72: #{custom-call.2} parent=57 // pred_region
              loop: start=0, step=1, limit=1
              $region74: #{custom-call.2} parent=72 // loop_pre_header
                _
              $region75: #{custom-call.2} parent=72 // loop_header
                %s151 = sphi 0, %s155
                %p152 = scmp.ge.s32.totalorder %s151, 1
                %s156 = sphi %s130, %s130
                %s157 = sphi %s128, %s128
              $region76: #{custom-call.2} parent=72 // loop_header_branch
                %154 = sbr.rel (%p152) target = $region80
              $region77: #{custom-call.2} parent=72 // loop_body
                %v158 = vld [vmem:[%s156] sm:$0xff]
                %159 = vst [vmem:[%s157] sm:$0xff] %v158
              $region78: #{custom-call.2} parent=72 // loop_footer
                %s155 = sadd.s32 1, %s151
              $region79: #{custom-call.2} parent=72 // loop_footer_branch
                %150 = sbr.rel target = $region75
              $region80: #{custom-call.2} parent=72 // loop_exit
                _
            $region73: #{custom-call.2} parent=57 // pred_fallthru
              _
            // Predicated region
            $region81: #{custom-call.2} parent=57 // pred_check
              _
            $region82: #{custom-call.2} parent=57 // pred_check_branch
              %161 = sbr.rel target = $region84
            $region83: #{custom-call.2} parent=57 // pred_region
              _
            $region84: #{custom-call.2} parent=57 // pred_fallthru
              _
          $region58: #{custom-call.2} parent=53 // pred_fallthru
            _
          // Predicated region
          $region59: #{custom-call.2} parent=53 // pred_check
            _
          $region60: #{custom-call.2} parent=53 // pred_check_branch
            %136 = sbr.rel target = $region62
          $region61: #{custom-call.2} parent=53 // pred_region
            loop: start=0, step=1, limit=1
            $region63: #{custom-call.2} parent=61 // loop_pre_header
              _
            $region64: #{custom-call.2} parent=61 // loop_header
              %s139 = sphi 0, %s143
              %p140 = scmp.ge.s32.totalorder %s139, 1
              %s144 = sphi %s130, %s130
              %s145 = sphi %s128, %s128
            $region65: #{custom-call.2} parent=61 // loop_header_branch
              %142 = sbr.rel (%p140) target = $region69
            $region66: #{custom-call.2} parent=61 // loop_body
              %v146 = vld [vmem:[%s144] sm:$0xff]
              %147 = vst [vmem:[%s145] sm:$0xff] %v146
            $region67: #{custom-call.2} parent=61 // loop_footer
              %s143 = sadd.s32 1, %s139
            $region68: #{custom-call.2} parent=61 // loop_footer_branch
              %138 = sbr.rel target = $region64
            $region69: #{custom-call.2} parent=61 // loop_exit
              _
          $region62: #{custom-call.2} parent=53 // pred_fallthru
            _
        $region54: #{custom-call.2} parent=15 // pred_fallthru
          _
        %162 = vnop
        %s163 = sand.u32 %s12, 1
        %s164 = sand.u32 %s12, 1
        %s165 = smul.addr %s164, 8
        %s166 = scalar_lea.vmem [#allocation2], %s165
        %s167 = smul.addr %s12, 8
        %s168 = scalar_lea.vmem %s2, %s167
        // Predicated region
        $region85: #{custom-call.2} parent=15 // pred_check
          _
        $region86: #{custom-call.2} parent=15 // pred_check_branch
          %170 = sbr.rel (0) target = $region88
        $region87: #{custom-call.2} parent=15 // pred_region
          // Predicated region
          $region89: #{custom-call.2} parent=87 // pred_check
            _
          $region90: #{custom-call.2} parent=87 // pred_check_branch
            %172 = sbr.rel (0) target = $region92
          $region91: #{custom-call.2} parent=87 // pred_region
            // Predicated region
            $region104: #{custom-call.2} parent=91 // pred_check
              _
            $region105: #{custom-call.2} parent=91 // pred_check_branch
              %187 = sbr.rel (0) target = $region107
            $region106: #{custom-call.2} parent=91 // pred_region
              loop: start=0, step=1, limit=1
              $region108: #{custom-call.2} parent=106 // loop_pre_header
                _
              $region109: #{custom-call.2} parent=106 // loop_header
                %s189 = sphi 0, %s193
                %p190 = scmp.ge.s32.totalorder %s189, 1
                %s194 = sphi %s168, %s168
                %s195 = sphi %s166, %s166
              $region110: #{custom-call.2} parent=106 // loop_header_branch
                %192 = sbr.rel (%p190) target = $region114
              $region111: #{custom-call.2} parent=106 // loop_body
                %v196 = vld [vmem:[%s194] sm:$0xff]
                %197 = vst [vmem:[%s195] sm:$0xff] %v196
              $region112: #{custom-call.2} parent=106 // loop_footer
                %s193 = sadd.s32 1, %s189
              $region113: #{custom-call.2} parent=106 // loop_footer_branch
                %188 = sbr.rel target = $region109
              $region114: #{custom-call.2} parent=106 // loop_exit
                _
            $region107: #{custom-call.2} parent=91 // pred_fallthru
              _
            // Predicated region
            $region115: #{custom-call.2} parent=91 // pred_check
              _
            $region116: #{custom-call.2} parent=91 // pred_check_branch
              %199 = sbr.rel target = $region118
            $region117: #{custom-call.2} parent=91 // pred_region
              _
            $region118: #{custom-call.2} parent=91 // pred_fallthru
              _
          $region92: #{custom-call.2} parent=87 // pred_fallthru
            _
          // Predicated region
          $region93: #{custom-call.2} parent=87 // pred_check
            _
          $region94: #{custom-call.2} parent=87 // pred_check_branch
            %174 = sbr.rel target = $region96
          $region95: #{custom-call.2} parent=87 // pred_region
            loop: start=0, step=1, limit=1
            $region97: #{custom-call.2} parent=95 // loop_pre_header
              _
            $region98: #{custom-call.2} parent=95 // loop_header
              %s177 = sphi 0, %s181
              %p178 = scmp.ge.s32.totalorder %s177, 1
              %s182 = sphi %s168, %s168
              %s183 = sphi %s166, %s166
            $region99: #{custom-call.2} parent=95 // loop_header_branch
              %180 = sbr.rel (%p178) target = $region103
            $region100: #{custom-call.2} parent=95 // loop_body
              %v184 = vld [vmem:[%s182] sm:$0xff]
              %185 = vst [vmem:[%s183] sm:$0xff] %v184
            $region101: #{custom-call.2} parent=95 // loop_footer
              %s181 = sadd.s32 1, %s177
            $region102: #{custom-call.2} parent=95 // loop_footer_branch
              %176 = sbr.rel target = $region98
            $region103: #{custom-call.2} parent=95 // loop_exit
              _
          $region96: #{custom-call.2} parent=87 // pred_fallthru
            _
        $region88: #{custom-call.2} parent=15 // pred_fallthru
          _
        %200 = vnop
        %s201 = sand.u32 %s12, 1
        %s202 = sand.u32 %s12, 1
        %s203 = smul.addr %s202, 8
        %s204 = scalar_lea.vmem [#allocation3], %s203
        %s205 = smul.addr %s12, 8
        %s206 = scalar_lea.vmem %s3, %s205
        // Predicated region
        $region119: #{custom-call.2} parent=15 // pred_check
          _
        $region120: #{custom-call.2} parent=15 // pred_check_branch
          %208 = sbr.rel (0) target = $region122
        $region121: #{custom-call.2} parent=15 // pred_region
          // Predicated region
          $region123: #{custom-call.2} parent=121 // pred_check
            _
          $region124: #{custom-call.2} parent=121 // pred_check_branch
            %210 = sbr.rel (0) target = $region126
          $region125: #{custom-call.2} parent=121 // pred_region
            // Predicated region
            $region138: #{custom-call.2} parent=125 // pred_check
              _
            $region139: #{custom-call.2} parent=125 // pred_check_branch
              %225 = sbr.rel (0) target = $region141
            $region140: #{custom-call.2} parent=125 // pred_region
              loop: start=0, step=1, limit=1
              $region142: #{custom-call.2} parent=140 // loop_pre_header
                _
              $region143: #{custom-call.2} parent=140 // loop_header
                %s227 = sphi 0, %s231
                %p228 = scmp.ge.s32.totalorder %s227, 1
                %s232 = sphi %s206, %s206
                %s233 = sphi %s204, %s204
              $region144: #{custom-call.2} parent=140 // loop_header_branch
                %230 = sbr.rel (%p228) target = $region148
              $region145: #{custom-call.2} parent=140 // loop_body
                %v234 = vld [vmem:[%s232] sm:$0xff]
                %235 = vst [vmem:[%s233] sm:$0xff] %v234
              $region146: #{custom-call.2} parent=140 // loop_footer
                %s231 = sadd.s32 1, %s227
              $region147: #{custom-call.2} parent=140 // loop_footer_branch
                %226 = sbr.rel target = $region143
              $region148: #{custom-call.2} parent=140 // loop_exit
                _
            $region141: #{custom-call.2} parent=125 // pred_fallthru
              _
            // Predicated region
            $region149: #{custom-call.2} parent=125 // pred_check
              _
            $region150: #{custom-call.2} parent=125 // pred_check_branch
              %237 = sbr.rel target = $region152
            $region151: #{custom-call.2} parent=125 // pred_region
              _
            $region152: #{custom-call.2} parent=125 // pred_fallthru
              _
          $region126: #{custom-call.2} parent=121 // pred_fallthru
            _
          // Predicated region
          $region127: #{custom-call.2} parent=121 // pred_check
            _
          $region128: #{custom-call.2} parent=121 // pred_check_branch
            %212 = sbr.rel target = $region130
          $region129: #{custom-call.2} parent=121 // pred_region
            loop: start=0, step=1, limit=1
            $region131: #{custom-call.2} parent=129 // loop_pre_header
              _
            $region132: #{custom-call.2} parent=129 // loop_header
              %s215 = sphi 0, %s219
              %p216 = scmp.ge.s32.totalorder %s215, 1
              %s220 = sphi %s206, %s206
              %s221 = sphi %s204, %s204
            $region133: #{custom-call.2} parent=129 // loop_header_branch
              %218 = sbr.rel (%p216) target = $region137
            $region134: #{custom-call.2} parent=129 // loop_body
              %v222 = vld [vmem:[%s220] sm:$0xff]
              %223 = vst [vmem:[%s221] sm:$0xff] %v222
            $region135: #{custom-call.2} parent=129 // loop_footer
              %s219 = sadd.s32 1, %s215
            $region136: #{custom-call.2} parent=129 // loop_footer_branch
              %214 = sbr.rel target = $region132
            $region137: #{custom-call.2} parent=129 // loop_exit
              _
          $region130: #{custom-call.2} parent=121 // pred_fallthru
            _
        $region122: #{custom-call.2} parent=15 // pred_fallthru
          _
        %238 = vnop
      $region16: #{custom-call.2} parent=5 // pred_fallthru
        _
      %p239 = scmp.le.s32.totalorder 1, %s12
      %p240 = scmp.lt.s32.totalorder %s12, 3
      %p241 = pnand %p239, %p240
      %p242 = pneg %p241
      // Predicated region
      $region153: #{custom-call.2} parent=5 // pred_check
        _
      $region154: #{custom-call.2} parent=5 // pred_check_branch
        %244 = sbr.rel (%p241) target = $region156
      $region155: #{custom-call.2} parent=5 // pred_region
        #allocation12 [shape = 'f32[8,8]{1,0}', space=vmem, size = 0x1000, scoped, tag = 'a top-left matrix']
        #allocation13 [shape = 'f32[8,8]{1,0}', space=vmem, size = 0x1000, scoped, tag = 'a top-right matrix']
        #allocation14 [shape = 'f32[8,8]{1,0}', space=vmem, size = 0x1000, scoped, tag = 'a bottom-left matrix']
        #allocation15 [shape = 'f32[8,8]{1,0}', space=vmem, size = 0x1000, scoped, tag = 'a bottom-right matrix']
        %s245 = ssub.s32 %s12, 1
        %s246 = sand.u32 %s17, 1
        %s247 = sand.u32 %s17, 1
        %s248 = smul.addr %s247, 8
        %s249 = scalar_lea.vmem [#allocation0], %s248
        %s250 = sand.u32 %s17, 1
        %s251 = sand.u32 %s17, 1
        %s252 = smul.addr %s251, 8
        %s253 = scalar_lea.vmem [#allocation1], %s252
        %s254 = sand.u32 %s17, 1
        %s255 = sand.u32 %s17, 1
        %s256 = smul.addr %s255, 8
        %s257 = scalar_lea.vmem [#allocation2], %s256
        %s258 = sand.u32 %s17, 1
        %s259 = sand.u32 %s17, 1
        %s260 = smul.addr %s259, 8
        %s261 = scalar_lea.vmem [#allocation3], %s260
        %s262 = sand.u32 %s17, 1
        %s263 = sand.u32 %s17, 1
        %s264 = smul.addr %s263, 8
        %s265 = scalar_lea.vmem [#allocation0], %s264
        %s266 = sand.u32 %s17, 1
        %s267 = sand.u32 %s17, 1
        %s268 = smul.addr %s267, 8
        %s269 = scalar_lea.vmem [#allocation1], %s268
        %s270 = sand.u32 %s17, 1
        %s271 = sand.u32 %s17, 1
        %s272 = smul.addr %s271, 8
        %s273 = scalar_lea.vmem [#allocation2], %s272
        %s274 = sand.u32 %s17, 1
        %s275 = sand.u32 %s17, 1
        %s276 = smul.addr %s275, 8
        %s277 = scalar_lea.vmem [#allocation3], %s276
        %p278 = pneg %p40
        %p279 = pneg %p37
        %s280 = sand.u32 %s27, 1
        %s281 = sand.u32 %s27, 1
        %s282 = smul.addr %s281, 2
        %s283 = scalar_lea.vmem [#allocation5], %s282
        %p284 = pneg %p68
        %p285 = pneg %p65
        %s286 = sand.u32 %s55, 1
        %s287 = sand.u32 %s55, 1
        %s288 = smul.addr %s287, 2
        %s289 = scalar_lea.vmem [#allocation7], %s288
        %s290 = sand.u32 %s17, 1
        %s291 = sand.u32 %s17, 1
        %s292 = smul.addr %s291, 8
        %s293 = scalar_lea.vmem [#allocation8], %s292
        %s294 = sand.u32 %s17, 1
        %s295 = sand.u32 %s17, 1
        %s296 = smul.addr %s295, 8
        %s297 = scalar_lea.vmem [#allocation9], %s296
        %s298 = sand.u32 %s17, 1
        %s299 = sand.u32 %s17, 1
        %s300 = smul.addr %s299, 8
        %s301 = scalar_lea.vmem [#allocation10], %s300
        %s302 = sand.u32 %s17, 1
        %s303 = sand.u32 %s17, 1
        %s304 = smul.addr %s303, 8
        %s305 = scalar_lea.vmem [#allocation11], %s304
        %s306 = sshrl.u32 %s17, 3
        %s307 = sshrl.u32 %s17, 3
        %s308 = smov [#allocation12]
        %v309 = vld [vmem:[%s249] sm:$0xff]
        %310 = vst [vmem:[%s308] sm:$0xff] %v309
        %s311 = smov [#allocation13]
        %v312 = vld [vmem:[%s253] sm:$0xff]
        %313 = vst [vmem:[%s311] sm:$0xff] %v312
        %s314 = smov [#allocation14]
        %v315 = vld [vmem:[%s257] sm:$0xff]
        %316 = vst [vmem:[%s314] sm:$0xff] %v315
        %s317 = smov [#allocation15]
        %v318 = vld [vmem:[%s261] sm:$0xff]
        %319 = vst [vmem:[%s317] sm:$0xff] %v318
        %320 = vst [vmem:[%s293] sm:$0xff] 0.0
        %321 = vst [vmem:[%s297] sm:$0xff] 0.0
        %322 = vst [vmem:[%s301] sm:$0xff] 0.0
        %323 = vst [vmem:[%s305] sm:$0xff] 0.0
        %s324 = smov %s293
        %v325 = vlaneseq
        %v326 = vand.u32 %v325, 127
        %v327 = vmov %v326
        %v328 = vlaneseq
        %v329 = vshrl.u32 %v328, 7
        %v330 = vmov %v329
        %v331 = vld [vmem:[%s324] sm:$0xff]
        %vm334 = vcmp.eq.s32.totalorder %v330, %v327
        %v335 = vsel %vm334, 1.0, %v331
        %336 = vst [vmem:[%s324] sm:$0xff] %v335
        %s337 = smov %s305
        %v338 = vlaneseq
        %v339 = vand.u32 %v338, 127
        %v340 = vmov %v339
        %v341 = vlaneseq
        %v342 = vshrl.u32 %v341, 7
        %v343 = vmov %v342
        %v344 = vld [vmem:[%s337] sm:$0xff]
        %vm347 = vcmp.eq.s32.totalorder %v343, %v340
        %v348 = vsel %vm347, 1.0, %v344
        %349 = vst [vmem:[%s337] sm:$0xff] %v348
        // While loop
        $region157: #{custom-call.2} parent=155 // loop_pre_header
          _
        $region158: #{custom-call.2} parent=155 // loop_header
          %s351 = sphi 0, %s893
          %v352 = vlaneseq
          %v353 = vand.u32 %v352, 127
          %v354 = vmov %v353
          %v355 = vlaneseq
          %v356 = vshrl.u32 %v355, 7
          %v357 = vmov %v356
          %s358 = smov [#allocation12]
          %v359 = vlaneseq
          %v360 = vand.u32 %v359, 127
          %vm361 = vcmp.ge.s32.totalorder %v360, 0
          %vm362 = vcmp.lt.s32.totalorder %v360, 8
          %vm363 = vmand %vm361, %vm362
          %v364 = vld [vmem:[%s358] sm:$0xff]
          %v365 = vsel %vm363, %v364, 0.0
          %v366 = vmul.f32 %v365, %v365
          %vm369 = vcmp.eq.s32.totalorder %v357, %v354
          %v370 = vsel %vm369, 0.0, %v366
          %v371 = vlaneseq
          %v372 = vand.u32 %v371, 127
          %v373 = vmov %v372
          %v374 = vlaneseq
          %v375 = vshrl.u32 %v374, 7
          %v376 = vmov %v375
          %s377 = smov [#allocation13]
          %v378 = vlaneseq
          %v379 = vand.u32 %v378, 127
          %vm380 = vcmp.ge.s32.totalorder %v379, 0
          %vm381 = vcmp.lt.s32.totalorder %v379, 8
          %vm382 = vmand %vm380, %vm381
          %v383 = vld [vmem:[%s377] sm:$0xff]
          %v384 = vsel %vm382, %v383, 0.0
          %v385 = vmul.f32 %v384, %v384
          %v386 = vadd.f32 %v370, %v385
          %v387 = vadd.f32 %v366, %v385
          %v388 = vlaneseq
          %v389 = vand.u32 %v388, 127
          %v390 = vmov %v389
          %v391 = vlaneseq
          %v392 = vshrl.u32 %v391, 7
          %v393 = vmov %v392
          %s394 = smov [#allocation14]
          %v395 = vlaneseq
          %v396 = vand.u32 %v395, 127
          %vm397 = vcmp.ge.s32.totalorder %v396, 0
          %vm398 = vcmp.lt.s32.totalorder %v396, 8
          %vm399 = vmand %vm397, %vm398
          %v400 = vld [vmem:[%s394] sm:$0xff]
          %v401 = vsel %vm399, %v400, 0.0
          %v402 = vmul.f32 %v401, %v401
          %v403 = vadd.f32 %v386, %v402
          %v404 = vadd.f32 %v387, %v402
          %v405 = vlaneseq
          %v406 = vand.u32 %v405, 127
          %v407 = vmov %v406
          %v408 = vlaneseq
          %v409 = vshrl.u32 %v408, 7
          %v410 = vmov %v409
          %s411 = smov [#allocation15]
          %v412 = vlaneseq
          %v413 = vand.u32 %v412, 127
          %vm414 = vcmp.ge.s32.totalorder %v413, 0
          %vm415 = vcmp.lt.s32.totalorder %v413, 8
          %vm416 = vmand %vm414, %vm415
          %v417 = vld [vmem:[%s411] sm:$0xff]
          %v418 = vsel %vm416, %v417, 0.0
          %v419 = vmul.f32 %v418, %v418
          %vm422 = vcmp.eq.s32.totalorder %v410, %v407
          %v423 = vsel %vm422, 0.0, %v419
          %v424 = vadd.f32 %v403, %v423
          %v425 = vadd.f32 %v404, %v419
          %426 = vadd.xlane.f32.xlu0 %v425
          %v427 = vpop.xlane.xlu0 %426
          %v428 = vrot.slane %v427, 4
          %v429 = vadd.f32 %v427, %v428
          %v430 = vrot.slane %v429, 2
          %v431 = vadd.f32 %v429, %v430
          %v432 = vrot.slane %v431, 1
          %v433 = vadd.f32 %v431, %v432
          %434 = vadd.xlane.f32.xlu0 %v424
          %v435 = vpop.xlane.xlu0 %434
          %v436 = vrot.slane %v435, 4
          %v437 = vadd.f32 %v435, %v436
          %v438 = vrot.slane %v437, 2
          %v439 = vadd.f32 %v437, %v438
          %v440 = vrot.slane %v439, 1
          %v441 = vadd.f32 %v439, %v440
          %s442 = vtos %v441
          %s443 = vtos %v433
          %s444 = smul.f32 1e-10, %s443
          %p445 = scmp.le.f32.partialorder %s442, %s444
          %p446 = scmp.ge.s32.totalorder %s351, 15
          %p447 = por %p445, %p446
        $region159: #{custom-call.2} parent=155 // loop_header_branch
          %895 = sbr.rel (%p447) target = $region163
        $region160: #{custom-call.2} parent=155 // loop_body
          loop: start=0, step=1, limit=15
          $region164: #{custom-call.2} parent=160 // loop_pre_header
            _
          $region165: #{custom-call.2} parent=160 // loop_header
            %s449 = sphi 0, %s453
            %p450 = scmp.ge.s32.totalorder %s449, 15
          $region166: #{custom-call.2} parent=160 // loop_header_branch
            %452 = sbr.rel (%p450) target = $region170
          $region167: #{custom-call.2} parent=160 // loop_body
            #allocation16 [shape = 'f32[1024]{0}', space=vmem, size = 0x1000, scoped, tag = 'a_tl_diag vmem']
            #allocation17 [shape = 'f32[1024]{0}', space=vmem, size = 0x1000, scoped, tag = 'a_tr_diag vmem']
            #allocation18 [shape = 'f32[1024]{0}', space=vmem, size = 0x1000, scoped, tag = 'a_br_diag vmem']
            #allocation19 [shape = 'f32[1024]{0}', space=vmem, size = 0x1000, scoped, tag = 'rt1 vmem']
            #allocation20 [shape = 'f32[1024]{0}', space=vmem, size = 0x1000, scoped, tag = 'rt2 vmem']
            #allocation21 [shape = 'f32[1024]{0}', space=vmem, size = 0x1000, scoped, tag = 'c vmem']
            #allocation22 [shape = 'f32[1024]{0}', space=vmem, size = 0x1000, scoped, tag = 's vmem']
            #allocation23 [shape = 'f32[4096]{0}', space=vmem, size = 0x4000, scoped, tag = 'c broadcast']
            #allocation24 [shape = 'f32[4096]{0}', space=vmem, size = 0x4000, scoped, tag = 's broadcast']
            %s454 = smov [#allocation12]
            %s455 = smov [#allocation16]
            %v456 = vlaneseq
            %v457 = vand.u32 %v456, 127
            %v458 = vmov %v457
            %v459 = vlaneseq
            %v460 = vshrl.u32 %v459, 7
            %v461 = vmov %v460
            %v462 = vld [vmem:[%s454] sm:$0xff]
            %vm465 = vcmp.eq.s32.totalorder %v461, %v458
            %v466 = vsel %vm465, %v462, 0.0
            %v467 = vrot.slane %v466, 4
            %v468 = vadd.f32 %v466, %v467
            %v469 = vrot.slane %v468, 2
            %v470 = vadd.f32 %v468, %v469
            %v471 = vrot.slane %v470, 1
            %v472 = vadd.f32 %v470, %v471
            %473 = vst [vmem:[%s455] sm:$0x1] %v472
            %s474 = smov [#allocation13]
            %s475 = smov [#allocation17]
            %v476 = vlaneseq
            %v477 = vand.u32 %v476, 127
            %v478 = vmov %v477
            %v479 = vlaneseq
            %v480 = vshrl.u32 %v479, 7
            %v481 = vmov %v480
            %v482 = vld [vmem:[%s474] sm:$0xff]
            %vm485 = vcmp.eq.s32.totalorder %v481, %v478
            %v486 = vsel %vm485, %v482, 0.0
            %v487 = vrot.slane %v486, 4
            %v488 = vadd.f32 %v486, %v487
            %v489 = vrot.slane %v488, 2
            %v490 = vadd.f32 %v488, %v489
            %v491 = vrot.slane %v490, 1
            %v492 = vadd.f32 %v490, %v491
            %493 = vst [vmem:[%s475] sm:$0x1] %v492
            %s494 = smov [#allocation15]
            %s495 = smov [#allocation18]
            %v496 = vlaneseq
            %v497 = vand.u32 %v496, 127
            %v498 = vmov %v497
            %v499 = vlaneseq
            %v500 = vshrl.u32 %v499, 7
            %v501 = vmov %v500
            %v502 = vld [vmem:[%s494] sm:$0xff]
            %vm505 = vcmp.eq.s32.totalorder %v501, %v498
            %v506 = vsel %vm505, %v502, 0.0
            %v507 = vrot.slane %v506, 4
            %v508 = vadd.f32 %v506, %v507
            %v509 = vrot.slane %v508, 2
            %v510 = vadd.f32 %v508, %v509
            %v511 = vrot.slane %v510, 1
            %v512 = vadd.f32 %v510, %v511
            %513 = vst [vmem:[%s495] sm:$0x1] %v512
            %s514 = smov [#allocation21]
            %s515 = smov [#allocation22]
            %s516 = smov [#allocation16]
            %v517 = vld [vmem:[%s516] sm:$0xff]
            %s518 = smov [#allocation17]
            %v519 = vld [vmem:[%s518] sm:$0xff]
            %s520 = smov [#allocation18]
            %v521 = vld [vmem:[%s520] sm:$0xff]
            %v522 = vsub.f32 %v521, %v517
            %v523 = vmul.f32 2.0, %v519
            %v524 = vrcp.pop %v523
            %v525 = vmul.f32 %v522, %v524
            %vm526 = vcmp.ge.f32.partialorder %v525, 0.0
            %v527 = vmul.f32 %v525, %v525
            %v528 = vadd.f32 1.0, %v527
            %v529 = vrsqrt.pop %v528
            %v530 = vmul.f32 %v528, %v529
            %vm531 = vcmp.eq.f32.partialorder %v528, inf
            %v532 = vsel %vm531, %v528, %v530
            %vm533 = vcmp.eq.f32.partialorder %v528, 0.0
            %v534 = vand.u32 %v528, 2147483648
            %v535 = vsel %vm533, %v534, %v532
            %v536 = vxor.u32 %v535, 2147483648
            %v537 = vsel %vm526, %v535, %v536
            %v538 = vadd.f32 %v525, %v537
            %v539 = vrcp.pop %v538
            %v540 = vand.u32 2147483647, %v517
            %v541 = vand.u32 2147483647, %v519
            %v542 = vand.u32 2147483647, %v521
            %v543 = vmin.f32 %v540, %v542
            %v544 = vmul.f32 1.1920929e-08, %v543
            %vm545 = vcmp.le.f32.partialorder %v541, %v544
            %v546 = vsel %vm545, 0.0, %v539
            %v547 = vmul.f32 %v546, %v546
            %v548 = vadd.f32 1.0, %v547
            %v549 = vrsqrt.pop %v548
            %v550 = vmul.f32 %v546, %v549
            %v551 = vmul.f32 %v546, %v519
            %v552 = vsub.f32 %v517, %v551
            %v553 = vmul.f32 %v546, %v519
            %v554 = vadd.f32 %v521, %v553
            %s555 = smov [#allocation19]
            %556 = vst [vmem:[%s555] sm:$0xff] %v552
            %s557 = smov [#allocation20]
            %558 = vst [vmem:[%s557] sm:$0xff] %v554
            %s559 = smov %s514
            %560 = vst [vmem:[%s559] sm:$0xff] %v549
            %s561 = smov %s515
            %562 = vst [vmem:[%s561] sm:$0xff] %v550
            %s563 = smov [#allocation21]
            %v564 = vld [vmem:[%s563] ss:$0 sm:$0xff]
            %v565 = vlaneseq
            %v566 = vand.u32 %v565, 127
            %v567 = vmov %v566
            %v568 = vlaneseq
            %v569 = vshrl.u32 %v568, 7
            %v570 = vmov %v569
            %vm572 = vcmp.eq.s32.totalorder %v570, %v567
            %v573 = vsel %vm572, %v564, 0.0
            %574 = vadd.xlane.f32.xlu0 %v573
            %v575 = vpop.xlane.xlu0 %574
            %s576 = smov [#allocation23]
            %577 = vst [vmem:[%s576] sm:$0xff] %v575
            %s578 = smov [#allocation22]
            %v579 = vld [vmem:[%s578] ss:$0 sm:$0xff]
            %v580 = vlaneseq
            %v581 = vand.u32 %v580, 127
            %v582 = vmov %v581
            %v583 = vlaneseq
            %v584 = vshrl.u32 %v583, 7
            %v585 = vmov %v584
            %vm587 = vcmp.eq.s32.totalorder %v585, %v582
            %v588 = vsel %vm587, %v579, 0.0
            %589 = vadd.xlane.f32.xlu0 %v588
            %v590 = vpop.xlane.xlu0 %589
            %s591 = smov [#allocation24]
            %592 = vst [vmem:[%s591] sm:$0xff] %v590
            %s593 = smov [#allocation23]
            %v594 = vld [vmem:[%s593] sm:$0xff]
            %s595 = smov [#allocation24]
            %v596 = vld [vmem:[%s595] sm:$0xff]
            %s597 = smov [#allocation12]
            %s598 = smov [#allocation13]
            %s599 = smov [#allocation14]
            %s600 = smov [#allocation15]
            %v601 = vld [vmem:[%s597] sm:$0xff]
            %v602 = vld [vmem:[%s598] sm:$0xff]
            %v603 = vld [vmem:[%s599] sm:$0xff]
            %v604 = vld [vmem:[%s600] sm:$0xff]
            %v605 = vmul.f32 %v594, %v601
            %v606 = vmul.f32 %v596, %v603
            %v607 = vsub.f32 %v605, %v606
            %v608 = vmul.f32 %v594, %v602
            %v609 = vmul.f32 %v596, %v604
            %v610 = vsub.f32 %v608, %v609
            %v611 = vmul.f32 %v596, %v601
            %v612 = vmul.f32 %v594, %v603
            %v613 = vadd.f32 %v611, %v612
            %v614 = vmul.f32 %v596, %v602
            %v615 = vmul.f32 %v594, %v604
            %v616 = vadd.f32 %v614, %v615
            %617 = vst [vmem:[%s597] sm:$0xff] %v607
            %618 = vst [vmem:[%s598] sm:$0xff] %v610
            %619 = vst [vmem:[%s599] sm:$0xff] %v613
            %620 = vst [vmem:[%s600] sm:$0xff] %v616
            %s621 = smov [#allocation21]
            %v622 = vld [vmem:[%s621] ss:$0 sm:$0xff]
            %s623 = smov [#allocation22]
            %v624 = vld [vmem:[%s623] ss:$0 sm:$0xff]
            %s625 = smov [#allocation12]
            %s626 = smov [#allocation13]
            %s627 = smov [#allocation14]
            %s628 = smov [#allocation15]
            %v629 = vld [vmem:[%s625] sm:$0xff]
            %v630 = vld [vmem:[%s626] sm:$0xff]
            %v631 = vld [vmem:[%s627] sm:$0xff]
            %v632 = vld [vmem:[%s628] sm:$0xff]
            %v633 = vmul.f32 %v622, %v629
            %v634 = vmul.f32 %v624, %v630
            %v635 = vsub.f32 %v633, %v634
            %v636 = vmul.f32 %v624, %v629
            %v637 = vmul.f32 %v622, %v630
            %v638 = vadd.f32 %v636, %v637
            %v639 = vmul.f32 %v622, %v631
            %v640 = vmul.f32 %v624, %v632
            %v641 = vsub.f32 %v639, %v640
            %v642 = vmul.f32 %v624, %v631
            %v643 = vmul.f32 %v622, %v632
            %v644 = vadd.f32 %v642, %v643
            %645 = vst [vmem:[%s625] sm:$0xff] %v635
            %646 = vst [vmem:[%s626] sm:$0xff] %v638
            %647 = vst [vmem:[%s627] sm:$0xff] %v641
            %648 = vst [vmem:[%s628] sm:$0xff] %v644
            %s649 = smov [#allocation12]
            %s650 = smov [#allocation19]
            %v651 = vlaneseq
            %v652 = vand.u32 %v651, 127
            %v653 = vmov %v652
            %v654 = vlaneseq
            %v655 = vshrl.u32 %v654, 7
            %v656 = vmov %v655
            %v657 = vld [vmem:[%s650] ss:$0 sm:$0xff]
            %v658 = vld [vmem:[%s649] sm:$0xff]
            %vm661 = vcmp.eq.s32.totalorder %v656, %v653
            %v662 = vsel %vm661, %v657, %v658
            %663 = vst [vmem:[%s649] sm:$0xff] %v662
            %s664 = smov [#allocation13]
            %v665 = vlaneseq
            %v666 = vand.u32 %v665, 127
            %v667 = vmov %v666
            %v668 = vlaneseq
            %v669 = vshrl.u32 %v668, 7
            %v670 = vmov %v669
            %v671 = vld [vmem:[%s664] sm:$0xff]
            %vm674 = vcmp.eq.s32.totalorder %v670, %v667
            %v675 = vsel %vm674, 0.0, %v671
            %676 = vst [vmem:[%s664] sm:$0xff] %v675
            %s677 = smov [#allocation14]
            %v678 = vlaneseq
            %v679 = vand.u32 %v678, 127
            %v680 = vmov %v679
            %v681 = vlaneseq
            %v682 = vshrl.u32 %v681, 7
            %v683 = vmov %v682
            %v684 = vld [vmem:[%s677] sm:$0xff]
            %vm687 = vcmp.eq.s32.totalorder %v683, %v680
            %v688 = vsel %vm687, 0.0, %v684
            %689 = vst [vmem:[%s677] sm:$0xff] %v688
            %s690 = smov [#allocation15]
            %s691 = smov [#allocation20]
            %v692 = vlaneseq
            %v693 = vand.u32 %v692, 127
            %v694 = vmov %v693
            %v695 = vlaneseq
            %v696 = vshrl.u32 %v695, 7
            %v697 = vmov %v696
            %v698 = vld [vmem:[%s691] ss:$0 sm:$0xff]
            %v699 = vld [vmem:[%s690] sm:$0xff]
            %vm702 = vcmp.eq.s32.totalorder %v697, %v694
            %v703 = vsel %vm702, %v698, %v699
            %704 = vst [vmem:[%s690] sm:$0xff] %v703
            %s705 = smov [#allocation12]
            %s706 = smov [#allocation13]
            %v707 = vld [vmem:[%s706] sm:$0xff]
            %708 = vrot.lane.b32.xlu0 %v707, 1
            %v709 = vpop.permute.xlu0 %708
            %v710 = vld [vmem:[%s705] sm:$0xff]
            %v711 = vld [vmem:[%s705] sm:$0xff]
            %712 = vrot.lane.b32.xlu0 %v711, 1
            %v713 = vpop.permute.xlu0 %712
            %v714 = vlaneseq
            %v715 = vand.u32 %v714, 127
            %vm716 = vcmp.eq.s32.totalorder %v715, 0
            %v717 = vsel %vm716, %v711, %v713
            %v718 = vlaneseq
            %v719 = vand.u32 %v718, 127
            %vm720 = vcmp.eq.s32.totalorder %v719, 1
            %v721 = vsel %vm720, %v709, %v717
            %v722 = vlaneseq
            %v723 = vand.u32 %v722, 127
            %vm724 = vcmp.ge.s32.totalorder %v723, 0
            %vm725 = vcmp.lt.s32.totalorder %v723, 8
            %vm726 = vmand %vm724, %vm725
            %v727 = vsel %vm726, %v721, 0.0
            %v728 = vld [vmem:[%s706] sm:$0xff]
            %729 = vrot.lane.b32.xlu0 %v728, 127
            %v730 = vpop.permute.xlu0 %729
            %v731 = vlaneseq
            %v732 = vand.u32 %v731, 127
            %vm733 = vcmp.eq.s32.totalorder %v732, 7
            %v734 = vsel %vm733, %v710, %v730
            %735 = vst [vmem:[%s705] sm:$0xff] %v727
            %736 = vst [vmem:[%s706] sm:$0xff] %v734
            %s737 = smov [#allocation14]
            %s738 = smov [#allocation15]
            %v739 = vld [vmem:[%s738] sm:$0xff]
            %740 = vrot.lane.b32.xlu0 %v739, 1
            %v741 = vpop.permute.xlu0 %740
            %v742 = vld [vmem:[%s737] sm:$0xff]
            %v743 = vld [vmem:[%s737] sm:$0xff]
            %744 = vrot.lane.b32.xlu0 %v743, 1
            %v745 = vpop.permute.xlu0 %744
            %v746 = vlaneseq
            %v747 = vand.u32 %v746, 127
            %vm748 = vcmp.eq.s32.totalorder %v747, 0
            %v749 = vsel %vm748, %v743, %v745
            %v750 = vlaneseq
            %v751 = vand.u32 %v750, 127
            %vm752 = vcmp.eq.s32.totalorder %v751, 1
            %v753 = vsel %vm752, %v741, %v749
            %v754 = vlaneseq
            %v755 = vand.u32 %v754, 127
            %vm756 = vcmp.ge.s32.totalorder %v755, 0
            %vm757 = vcmp.lt.s32.totalorder %v755, 8
            %vm758 = vmand %vm756, %vm757
            %v759 = vsel %vm758, %v753, 0.0
            %v760 = vld [vmem:[%s738] sm:$0xff]
            %761 = vrot.lane.b32.xlu0 %v760, 127
            %v762 = vpop.permute.xlu0 %761
            %v763 = vlaneseq
            %v764 = vand.u32 %v763, 127
            %vm765 = vcmp.eq.s32.totalorder %v764, 7
            %v766 = vsel %vm765, %v742, %v762
            %767 = vst [vmem:[%s737] sm:$0xff] %v759
            %768 = vst [vmem:[%s738] sm:$0xff] %v766
            %s769 = smov [#allocation12]
            %s770 = smov [#allocation14]
            %v771 = vld [vmem:[%s769] ss:$0 sm:$0xff]
            %s773 = scalar_lea.vmem %s769, 4294967295
            %v774 = vld [vmem:[%s773] sm:$0xfe]
            %v775 = vlaneseq
            %v776 = vshrl.u32 %v775, 7
            %vm777 = vcmp.eq.s32.totalorder %v776, 0
            %v778 = vsel %vm777, %v771, %v774
            %s779 = scalar_lea.vmem %s769, 7
            %v780 = vld [vmem:[%s779] ss:$0 sm:$0xff]
            %781 = vst [vmem:[%s769] sm:$0xff] %v778
            %v782 = vld [vmem:[%s770] ss:$0 sm:$0xff]
            %s783 = scalar_lea.vmem %s769, 1
            %784 = vst [vmem:[%s783] sm:$0x1] %v782
            %s785 = scalar_lea.vmem %s770, 1
            %v786 = vld [vmem:[%s785] sm:$0x7f]
            %v787 = vlaneseq
            %v788 = vshrl.u32 %v787, 7
            %vm789 = vcmp.eq.s32.totalorder %v788, 7
            %v790 = vsel %vm789, %v780, %v786
            %v791 = vld [vmem:[%s770] ss:$0 sm:$0xff]
            %792 = vst [vmem:[%s770] sm:$0xff] %v790
            %s793 = smov [#allocation13]
            %s794 = smov [#allocation15]
            %v795 = vld [vmem:[%s793] ss:$0 sm:$0xff]
            %s797 = scalar_lea.vmem %s793, 4294967295
            %v798 = vld [vmem:[%s797] sm:$0xfe]
            %v799 = vlaneseq
            %v800 = vshrl.u32 %v799, 7
            %vm801 = vcmp.eq.s32.totalorder %v800, 0
            %v802 = vsel %vm801, %v795, %v798
            %s803 = scalar_lea.vmem %s793, 7
            %v804 = vld [vmem:[%s803] ss:$0 sm:$0xff]
            %805 = vst [vmem:[%s793] sm:$0xff] %v802
            %v806 = vld [vmem:[%s794] ss:$0 sm:$0xff]
            %s807 = scalar_lea.vmem %s793, 1
            %808 = vst [vmem:[%s807] sm:$0x1] %v806
            %s809 = scalar_lea.vmem %s794, 1
            %v810 = vld [vmem:[%s809] sm:$0x7f]
            %v811 = vlaneseq
            %v812 = vshrl.u32 %v811, 7
            %vm813 = vcmp.eq.s32.totalorder %v812, 7
            %v814 = vsel %vm813, %v804, %v810
            %v815 = vld [vmem:[%s794] ss:$0 sm:$0xff]
            %816 = vst [vmem:[%s794] sm:$0xff] %v814
            %s817 = smov [#allocation23]
            %v818 = vld [vmem:[%s817] sm:$0xff]
            %s819 = smov [#allocation24]
            %v820 = vld [vmem:[%s819] sm:$0xff]
            %s821 = smov %s293
            %s822 = smov %s297
            %s823 = smov %s301
            %s824 = smov %s305
            %v825 = vld [vmem:[%s821] sm:$0xff]
            %v826 = vld [vmem:[%s822] sm:$0xff]
            %v827 = vld [vmem:[%s823] sm:$0xff]
            %v828 = vld [vmem:[%s824] sm:$0xff]
            %v829 = vmul.f32 %v818, %v825
            %v830 = vmul.f32 %v820, %v827
            %v831 = vsub.f32 %v829, %v830
            %v832 = vmul.f32 %v818, %v826
            %v833 = vmul.f32 %v820, %v828
            %v834 = vsub.f32 %v832, %v833
            %v835 = vmul.f32 %v820, %v825
            %v836 = vmul.f32 %v818, %v827
            %v837 = vadd.f32 %v835, %v836
            %v838 = vmul.f32 %v820, %v826
            %v839 = vmul.f32 %v818, %v828
            %v840 = vadd.f32 %v838, %v839
            %841 = vst [vmem:[%s821] sm:$0xff] %v831
            %842 = vst [vmem:[%s822] sm:$0xff] %v834
            %843 = vst [vmem:[%s823] sm:$0xff] %v837
            %844 = vst [vmem:[%s824] sm:$0xff] %v840
            %s845 = smov %s293
            %s846 = smov %s301
            %v847 = vld [vmem:[%s845] ss:$0 sm:$0xff]
            %s849 = scalar_lea.vmem %s845, 4294967295
            %v850 = vld [vmem:[%s849] sm:$0xfe]
            %v851 = vlaneseq
            %v852 = vshrl.u32 %v851, 7
            %vm853 = vcmp.eq.s32.totalorder %v852, 0
            %v854 = vsel %vm853, %v847, %v850
            %s855 = scalar_lea.vmem %s845, 7
            %v856 = vld [vmem:[%s855] ss:$0 sm:$0xff]
            %857 = vst [vmem:[%s845] sm:$0xff] %v854
            %v858 = vld [vmem:[%s846] ss:$0 sm:$0xff]
            %s859 = scalar_lea.vmem %s845, 1
            %860 = vst [vmem:[%s859] sm:$0x1] %v858
            %s861 = scalar_lea.vmem %s846, 1
            %v862 = vld [vmem:[%s861] sm:$0x7f]
            %v863 = vlaneseq
            %v864 = vshrl.u32 %v863, 7
            %vm865 = vcmp.eq.s32.totalorder %v864, 7
            %v866 = vsel %vm865, %v856, %v862
            %v867 = vld [vmem:[%s846] ss:$0 sm:$0xff]
            %868 = vst [vmem:[%s846] sm:$0xff] %v866
            %s869 = smov %s297
            %s870 = smov %s305
            %v871 = vld [vmem:[%s869] ss:$0 sm:$0xff]
            %s873 = scalar_lea.vmem %s869, 4294967295
            %v874 = vld [vmem:[%s873] sm:$0xfe]
            %v875 = vlaneseq
            %v876 = vshrl.u32 %v875, 7
            %vm877 = vcmp.eq.s32.totalorder %v876, 0
            %v878 = vsel %vm877, %v871, %v874
            %s879 = scalar_lea.vmem %s869, 7
            %v880 = vld [vmem:[%s879] ss:$0 sm:$0xff]
            %881 = vst [vmem:[%s869] sm:$0xff] %v878
            %v882 = vld [vmem:[%s870] ss:$0 sm:$0xff]
            %s883 = scalar_lea.vmem %s869, 1
            %884 = vst [vmem:[%s883] sm:$0x1] %v882
            %s885 = scalar_lea.vmem %s870, 1
            %v886 = vld [vmem:[%s885] sm:$0x7f]
            %v887 = vlaneseq
            %v888 = vshrl.u32 %v887, 7
            %vm889 = vcmp.eq.s32.totalorder %v888, 7
            %v890 = vsel %vm889, %v880, %v886
            %v891 = vld [vmem:[%s870] ss:$0 sm:$0xff]
            %892 = vst [vmem:[%s870] sm:$0xff] %v890
          $region168: #{custom-call.2} parent=160 // loop_footer
            %s453 = sadd.s32 1, %s449
          $region169: #{custom-call.2} parent=160 // loop_footer_branch
            %448 = sbr.rel target = $region165
          $region170: #{custom-call.2} parent=160 // loop_exit
            _
          %s893 = sadd.s32 %s351, 1
        $region161: #{custom-call.2} parent=155 // loop_footer
          _
        $region162: #{custom-call.2} parent=155 // loop_footer_branch
          %350 = sbr.rel target = $region158
        $region163: #{custom-call.2} parent=155 // loop_exit
          _
        %s896 = sand.u32 %s17, 7
        %s897 = scalar_lea.vmem [#allocation4], %s896
        %s898 = sand.u32 %s17, 7
        %s899 = scalar_lea.vmem [#allocation6], %s898
        %s900 = smov [#allocation12]
        %s901 = smov %s897
        %v902 = vlaneseq
        %v903 = vand.u32 %v902, 127
        %v904 = vmov %v903
        %v905 = vlaneseq
        %v906 = vshrl.u32 %v905, 7
        %v907 = vmov %v906
        %v908 = vld [vmem:[%s900] sm:$0xff]
        %vm911 = vcmp.eq.s32.totalorder %v907, %v904
        %v912 = vsel %vm911, %v908, 0.0
        %v913 = vrot.slane %v912, 4
        %v914 = vadd.f32 %v912, %v913
        %v915 = vrot.slane %v914, 2
        %v916 = vadd.f32 %v914, %v915
        %v917 = vrot.slane %v916, 1
        %v918 = vadd.f32 %v916, %v917
        %919 = vst [vmem:[%s901] sm:$0x1] %v918
        %s920 = smov [#allocation15]
        %s921 = smov %s899
        %v922 = vlaneseq
        %v923 = vand.u32 %v922, 127
        %v924 = vmov %v923
        %v925 = vlaneseq
        %v926 = vshrl.u32 %v925, 7
        %v927 = vmov %v926
        %v928 = vld [vmem:[%s920] sm:$0xff]
        %vm931 = vcmp.eq.s32.totalorder %v927, %v924
        %v932 = vsel %vm931, %v928, 0.0
        %v933 = vrot.slane %v932, 4
        %v934 = vadd.f32 %v932, %v933
        %v935 = vrot.slane %v934, 2
        %v936 = vadd.f32 %v934, %v935
        %v937 = vrot.slane %v936, 1
        %v938 = vadd.f32 %v936, %v937
        %939 = vst [vmem:[%s921] sm:$0x1] %v938
        %s941 = sshllo.u32 0, 2
        %v943 = vld [vmem:[#allocation4] sm:%s941]
        %s944 = sshllo.u32 0, 2
        %945 = vst [vmem:[%s283] sm:%s944] %v943
        %s947 = sshllo.u32 0, 2
        %v949 = vld [vmem:[#allocation6] sm:%s947]
        %s950 = sshllo.u32 0, 2
        %951 = vst [vmem:[%s289] sm:%s950] %v949
        %s952 = sand.u32 %s27, 1
        %s953 = sand.u32 %s27, 1
        %s954 = smul.addr %s953, 2
        %s955 = scalar_lea.vmem [#allocation5], %s954
        %s956 = sand.u32 %s55, 1
        %s957 = sand.u32 %s55, 1
        %s958 = smul.addr %s957, 2
        %s959 = scalar_lea.vmem [#allocation7], %s958
        %s960 = sand.u32 %s17, 1
        %s961 = sand.u32 %s17, 1
        %s962 = smul.addr %s961, 8
        %s963 = scalar_lea.vmem [#allocation8], %s962
        %s964 = sand.u32 %s17, 1
        %s965 = sand.u32 %s17, 1
        %s966 = smul.addr %s965, 8
        %s967 = scalar_lea.vmem [#allocation9], %s966
        %s968 = sand.u32 %s17, 1
        %s969 = sand.u32 %s17, 1
        %s970 = smul.addr %s969, 8
        %s971 = scalar_lea.vmem [#allocation10], %s970
        %s972 = sand.u32 %s17, 1
        %s973 = sand.u32 %s17, 1
        %s974 = smul.addr %s973, 8
        %s975 = scalar_lea.vmem [#allocation11], %s974
        // Predicated region
        $region171: #{custom-call.2} parent=155 // pred_check
          %p976 = pneg %p37
        $region172: #{custom-call.2} parent=155 // pred_check_branch
          %978 = sbr.rel (%p976) target = $region174
        $region173: #{custom-call.2} parent=155 // pred_region
          %s979 = sshrl.u32 %s17, 3
          %s980 = smul.addr %s979, 2
          %s981 = scalar_lea.vmem %s4, %s980
          // Predicated region
          $region175: #{custom-call.2} parent=173 // pred_check
            _
          $region176: #{custom-call.2} parent=173 // pred_check_branch
            %983 = sbr.rel (0) target = $region178
          $region177: #{custom-call.2} parent=173 // pred_region
            // Predicated region
            $region179: #{custom-call.2} parent=177 // pred_check
              _
            $region180: #{custom-call.2} parent=177 // pred_check_branch
              %985 = sbr.rel target = $region182
            $region181: #{custom-call.2} parent=177 // pred_region
              // Predicated region
              $region194: #{custom-call.2} parent=181 // pred_check
                _
              $region195: #{custom-call.2} parent=181 // pred_check_branch
                %1000 = sbr.rel (0) target = $region197
              $region196: #{custom-call.2} parent=181 // pred_region
                loop: start=0, step=1, limit=1
                $region198: #{custom-call.2} parent=196 // loop_pre_header
                  _
                $region199: #{custom-call.2} parent=196 // loop_header
                  %s1003 = sphi 0, %s1007
                  %p1004 = scmp.ge.s32.totalorder %s1003, 1
                  %s1008 = sphi %s955, %s955
                  %s1009 = sphi %s981, %s981
                $region200: #{custom-call.2} parent=196 // loop_header_branch
                  %1006 = sbr.rel (%p1004) target = $region204
                $region201: #{custom-call.2} parent=196 // loop_body
                  %v1010 = vld [vmem:[%s1008] sm:$0x3]
                  %1011 = vst [vmem:[%s1009] sm:$0x3] %v1010
                $region202: #{custom-call.2} parent=196 // loop_footer
                  %s1007 = sadd.s32 1, %s1003
                $region203: #{custom-call.2} parent=196 // loop_footer_branch
                  %1002 = sbr.rel target = $region199
                $region204: #{custom-call.2} parent=196 // loop_exit
                  _
              $region197: #{custom-call.2} parent=181 // pred_fallthru
                _
            $region182: #{custom-call.2} parent=177 // pred_fallthru
              _
            // Predicated region
            $region183: #{custom-call.2} parent=177 // pred_check
              _
            $region184: #{custom-call.2} parent=177 // pred_check_branch
              %987 = sbr.rel (0) target = $region186
            $region185: #{custom-call.2} parent=177 // pred_region
              loop: start=0, step=1, limit=1
              $region187: #{custom-call.2} parent=185 // loop_pre_header
                _
              $region188: #{custom-call.2} parent=185 // loop_header
                %s990 = sphi 0, %s994
                %p991 = scmp.ge.s32.totalorder %s990, 1
                %s995 = sphi %s955, %s955
                %s996 = sphi %s981, %s981
              $region189: #{custom-call.2} parent=185 // loop_header_branch
                %993 = sbr.rel (%p991) target = $region193
              $region190: #{custom-call.2} parent=185 // loop_body
                %v997 = vld [vmem:[%s995] sm:$0x3]
                %998 = vst [vmem:[%s996] sm:$0x3] %v997
              $region191: #{custom-call.2} parent=185 // loop_footer
                %s994 = sadd.s32 1, %s990
              $region192: #{custom-call.2} parent=185 // loop_footer_branch
                %989 = sbr.rel target = $region188
              $region193: #{custom-call.2} parent=185 // loop_exit
                _
            $region186: #{custom-call.2} parent=177 // pred_fallthru
              _
          $region178: #{custom-call.2} parent=173 // pred_fallthru
            _
          %1012 = vnop
        $region174: #{custom-call.2} parent=155 // pred_fallthru
          _
        // Predicated region
        $region205: #{custom-call.2} parent=155 // pred_check
          %p1013 = pneg %p65
        $region206: #{custom-call.2} parent=155 // pred_check_branch
          %1015 = sbr.rel (%p1013) target = $region208
        $region207: #{custom-call.2} parent=155 // pred_region
          %s1016 = sshrl.u32 %s17, 3
          %s1017 = smul.addr %s1016, 2
          %s1018 = scalar_lea.vmem %s5, %s1017
          // Predicated region
          $region209: #{custom-call.2} parent=207 // pred_check
            _
          $region210: #{custom-call.2} parent=207 // pred_check_branch
            %1020 = sbr.rel (0) target = $region212
          $region211: #{custom-call.2} parent=207 // pred_region
            // Predicated region
            $region213: #{custom-call.2} parent=211 // pred_check
              _
            $region214: #{custom-call.2} parent=211 // pred_check_branch
              %1022 = sbr.rel target = $region216
            $region215: #{custom-call.2} parent=211 // pred_region
              // Predicated region
              $region228: #{custom-call.2} parent=215 // pred_check
                _
              $region229: #{custom-call.2} parent=215 // pred_check_branch
                %1037 = sbr.rel (0) target = $region231
              $region230: #{custom-call.2} parent=215 // pred_region
                loop: start=0, step=1, limit=1
                $region232: #{custom-call.2} parent=230 // loop_pre_header
                  _
                $region233: #{custom-call.2} parent=230 // loop_header
                  %s1040 = sphi 0, %s1044
                  %p1041 = scmp.ge.s32.totalorder %s1040, 1
                  %s1045 = sphi %s959, %s959
                  %s1046 = sphi %s1018, %s1018
                $region234: #{custom-call.2} parent=230 // loop_header_branch
                  %1043 = sbr.rel (%p1041) target = $region238
                $region235: #{custom-call.2} parent=230 // loop_body
                  %v1047 = vld [vmem:[%s1045] sm:$0x3]
                  %1048 = vst [vmem:[%s1046] sm:$0x3] %v1047
                $region236: #{custom-call.2} parent=230 // loop_footer
                  %s1044 = sadd.s32 1, %s1040
                $region237: #{custom-call.2} parent=230 // loop_footer_branch
                  %1039 = sbr.rel target = $region233
                $region238: #{custom-call.2} parent=230 // loop_exit
                  _
              $region231: #{custom-call.2} parent=215 // pred_fallthru
                _
            $region216: #{custom-call.2} parent=211 // pred_fallthru
              _
            // Predicated region
            $region217: #{custom-call.2} parent=211 // pred_check
              _
            $region218: #{custom-call.2} parent=211 // pred_check_branch
              %1024 = sbr.rel (0) target = $region220
            $region219: #{custom-call.2} parent=211 // pred_region
              loop: start=0, step=1, limit=1
              $region221: #{custom-call.2} parent=219 // loop_pre_header
                _
              $region222: #{custom-call.2} parent=219 // loop_header
                %s1027 = sphi 0, %s1031
                %p1028 = scmp.ge.s32.totalorder %s1027, 1
                %s1032 = sphi %s959, %s959
                %s1033 = sphi %s1018, %s1018
              $region223: #{custom-call.2} parent=219 // loop_header_branch
                %1030 = sbr.rel (%p1028) target = $region227
              $region224: #{custom-call.2} parent=219 // loop_body
                %v1034 = vld [vmem:[%s1032] sm:$0x3]
                %1035 = vst [vmem:[%s1033] sm:$0x3] %v1034
              $region225: #{custom-call.2} parent=219 // loop_footer
                %s1031 = sadd.s32 1, %s1027
              $region226: #{custom-call.2} parent=219 // loop_footer_branch
                %1026 = sbr.rel target = $region222
              $region227: #{custom-call.2} parent=219 // loop_exit
                _
            $region220: #{custom-call.2} parent=211 // pred_fallthru
              _
          $region212: #{custom-call.2} parent=207 // pred_fallthru
            _
          %1049 = vnop
        $region208: #{custom-call.2} parent=155 // pred_fallthru
          _
        %s1050 = smul.addr %s17, 8
        %s1051 = scalar_lea.vmem %s6, %s1050
        // Predicated region
        $region239: #{custom-call.2} parent=155 // pred_check
          _
        $region240: #{custom-call.2} parent=155 // pred_check_branch
          %1053 = sbr.rel (0) target = $region242
        $region241: #{custom-call.2} parent=155 // pred_region
          // Predicated region
          $region243: #{custom-call.2} parent=241 // pred_check
            _
          $region244: #{custom-call.2} parent=241 // pred_check_branch
            %1055 = sbr.rel (0) target = $region246
          $region245: #{custom-call.2} parent=241 // pred_region
            // Predicated region
            $region258: #{custom-call.2} parent=245 // pred_check
              _
            $region259: #{custom-call.2} parent=245 // pred_check_branch
              %1070 = sbr.rel (0) target = $region261
            $region260: #{custom-call.2} parent=245 // pred_region
              loop: start=0, step=1, limit=1
              $region262: #{custom-call.2} parent=260 // loop_pre_header
                _
              $region263: #{custom-call.2} parent=260 // loop_header
                %s1072 = sphi 0, %s1076
                %p1073 = scmp.ge.s32.totalorder %s1072, 1
                %s1077 = sphi %s963, %s963
                %s1078 = sphi %s1051, %s1051
              $region264: #{custom-call.2} parent=260 // loop_header_branch
                %1075 = sbr.rel (%p1073) target = $region268
              $region265: #{custom-call.2} parent=260 // loop_body
                %v1079 = vld [vmem:[%s1077] sm:$0xff]
                %1080 = vst [vmem:[%s1078] sm:$0xff] %v1079
              $region266: #{custom-call.2} parent=260 // loop_footer
                %s1076 = sadd.s32 1, %s1072
              $region267: #{custom-call.2} parent=260 // loop_footer_branch
                %1071 = sbr.rel target = $region263
              $region268: #{custom-call.2} parent=260 // loop_exit
                _
            $region261: #{custom-call.2} parent=245 // pred_fallthru
              _
            // Predicated region
            $region269: #{custom-call.2} parent=245 // pred_check
              _
            $region270: #{custom-call.2} parent=245 // pred_check_branch
              %1082 = sbr.rel target = $region272
            $region271: #{custom-call.2} parent=245 // pred_region
              _
            $region272: #{custom-call.2} parent=245 // pred_fallthru
              _
          $region246: #{custom-call.2} parent=241 // pred_fallthru
            _
          // Predicated region
          $region247: #{custom-call.2} parent=241 // pred_check
            _
          $region248: #{custom-call.2} parent=241 // pred_check_branch
            %1057 = sbr.rel target = $region250
          $region249: #{custom-call.2} parent=241 // pred_region
            loop: start=0, step=1, limit=1
            $region251: #{custom-call.2} parent=249 // loop_pre_header
              _
            $region252: #{custom-call.2} parent=249 // loop_header
              %s1060 = sphi 0, %s1064
              %p1061 = scmp.ge.s32.totalorder %s1060, 1
              %s1065 = sphi %s963, %s963
              %s1066 = sphi %s1051, %s1051
            $region253: #{custom-call.2} parent=249 // loop_header_branch
              %1063 = sbr.rel (%p1061) target = $region257
            $region254: #{custom-call.2} parent=249 // loop_body
              %v1067 = vld [vmem:[%s1065] sm:$0xff]
              %1068 = vst [vmem:[%s1066] sm:$0xff] %v1067
            $region255: #{custom-call.2} parent=249 // loop_footer
              %s1064 = sadd.s32 1, %s1060
            $region256: #{custom-call.2} parent=249 // loop_footer_branch
              %1059 = sbr.rel target = $region252
            $region257: #{custom-call.2} parent=249 // loop_exit
              _
          $region250: #{custom-call.2} parent=241 // pred_fallthru
            _
        $region242: #{custom-call.2} parent=155 // pred_fallthru
          _
        %1083 = vnop
        %s1084 = smul.addr %s17, 8
        %s1085 = scalar_lea.vmem %s7, %s1084
        // Predicated region
        $region273: #{custom-call.2} parent=155 // pred_check
          _
        $region274: #{custom-call.2} parent=155 // pred_check_branch
          %1087 = sbr.rel (0) target = $region276
        $region275: #{custom-call.2} parent=155 // pred_region
          // Predicated region
          $region277: #{custom-call.2} parent=275 // pred_check
            _
          $region278: #{custom-call.2} parent=275 // pred_check_branch
            %1089 = sbr.rel (0) target = $region280
          $region279: #{custom-call.2} parent=275 // pred_region
            // Predicated region
            $region292: #{custom-call.2} parent=279 // pred_check
              _
            $region293: #{custom-call.2} parent=279 // pred_check_branch
              %1104 = sbr.rel (0) target = $region295
            $region294: #{custom-call.2} parent=279 // pred_region
              loop: start=0, step=1, limit=1
              $region296: #{custom-call.2} parent=294 // loop_pre_header
                _
              $region297: #{custom-call.2} parent=294 // loop_header
                %s1106 = sphi 0, %s1110
                %p1107 = scmp.ge.s32.totalorder %s1106, 1
                %s1111 = sphi %s967, %s967
                %s1112 = sphi %s1085, %s1085
              $region298: #{custom-call.2} parent=294 // loop_header_branch
                %1109 = sbr.rel (%p1107) target = $region302
              $region299: #{custom-call.2} parent=294 // loop_body
                %v1113 = vld [vmem:[%s1111] sm:$0xff]
                %1114 = vst [vmem:[%s1112] sm:$0xff] %v1113
              $region300: #{custom-call.2} parent=294 // loop_footer
                %s1110 = sadd.s32 1, %s1106
              $region301: #{custom-call.2} parent=294 // loop_footer_branch
                %1105 = sbr.rel target = $region297
              $region302: #{custom-call.2} parent=294 // loop_exit
                _
            $region295: #{custom-call.2} parent=279 // pred_fallthru
              _
            // Predicated region
            $region303: #{custom-call.2} parent=279 // pred_check
              _
            $region304: #{custom-call.2} parent=279 // pred_check_branch
              %1116 = sbr.rel target = $region306
            $region305: #{custom-call.2} parent=279 // pred_region
              _
            $region306: #{custom-call.2} parent=279 // pred_fallthru
              _
          $region280: #{custom-call.2} parent=275 // pred_fallthru
            _
          // Predicated region
          $region281: #{custom-call.2} parent=275 // pred_check
            _
          $region282: #{custom-call.2} parent=275 // pred_check_branch
            %1091 = sbr.rel target = $region284
          $region283: #{custom-call.2} parent=275 // pred_region
            loop: start=0, step=1, limit=1
            $region285: #{custom-call.2} parent=283 // loop_pre_header
              _
            $region286: #{custom-call.2} parent=283 // loop_header
              %s1094 = sphi 0, %s1098
              %p1095 = scmp.ge.s32.totalorder %s1094, 1
              %s1099 = sphi %s967, %s967
              %s1100 = sphi %s1085, %s1085
            $region287: #{custom-call.2} parent=283 // loop_header_branch
              %1097 = sbr.rel (%p1095) target = $region291
            $region288: #{custom-call.2} parent=283 // loop_body
              %v1101 = vld [vmem:[%s1099] sm:$0xff]
              %1102 = vst [vmem:[%s1100] sm:$0xff] %v1101
            $region289: #{custom-call.2} parent=283 // loop_footer
              %s1098 = sadd.s32 1, %s1094
            $region290: #{custom-call.2} parent=283 // loop_footer_branch
              %1093 = sbr.rel target = $region286
            $region291: #{custom-call.2} parent=283 // loop_exit
              _
          $region284: #{custom-call.2} parent=275 // pred_fallthru
            _
        $region276: #{custom-call.2} parent=155 // pred_fallthru
          _
        %1117 = vnop
        %s1118 = smul.addr %s17, 8
        %s1119 = scalar_lea.vmem %s8, %s1118
        // Predicated region
        $region307: #{custom-call.2} parent=155 // pred_check
          _
        $region308: #{custom-call.2} parent=155 // pred_check_branch
          %1121 = sbr.rel (0) target = $region310
        $region309: #{custom-call.2} parent=155 // pred_region
          // Predicated region
          $region311: #{custom-call.2} parent=309 // pred_check
            _
          $region312: #{custom-call.2} parent=309 // pred_check_branch
            %1123 = sbr.rel (0) target = $region314
          $region313: #{custom-call.2} parent=309 // pred_region
            // Predicated region
            $region326: #{custom-call.2} parent=313 // pred_check
              _
            $region327: #{custom-call.2} parent=313 // pred_check_branch
              %1138 = sbr.rel (0) target = $region329
            $region328: #{custom-call.2} parent=313 // pred_region
              loop: start=0, step=1, limit=1
              $region330: #{custom-call.2} parent=328 // loop_pre_header
                _
              $region331: #{custom-call.2} parent=328 // loop_header
                %s1140 = sphi 0, %s1144
                %p1141 = scmp.ge.s32.totalorder %s1140, 1
                %s1145 = sphi %s971, %s971
                %s1146 = sphi %s1119, %s1119
              $region332: #{custom-call.2} parent=328 // loop_header_branch
                %1143 = sbr.rel (%p1141) target = $region336
              $region333: #{custom-call.2} parent=328 // loop_body
                %v1147 = vld [vmem:[%s1145] sm:$0xff]
                %1148 = vst [vmem:[%s1146] sm:$0xff] %v1147
              $region334: #{custom-call.2} parent=328 // loop_footer
                %s1144 = sadd.s32 1, %s1140
              $region335: #{custom-call.2} parent=328 // loop_footer_branch
                %1139 = sbr.rel target = $region331
              $region336: #{custom-call.2} parent=328 // loop_exit
                _
            $region329: #{custom-call.2} parent=313 // pred_fallthru
              _
            // Predicated region
            $region337: #{custom-call.2} parent=313 // pred_check
              _
            $region338: #{custom-call.2} parent=313 // pred_check_branch
              %1150 = sbr.rel target = $region340
            $region339: #{custom-call.2} parent=313 // pred_region
              _
            $region340: #{custom-call.2} parent=313 // pred_fallthru
              _
          $region314: #{custom-call.2} parent=309 // pred_fallthru
            _
          // Predicated region
          $region315: #{custom-call.2} parent=309 // pred_check
            _
          $region316: #{custom-call.2} parent=309 // pred_check_branch
            %1125 = sbr.rel target = $region318
          $region317: #{custom-call.2} parent=309 // pred_region
            loop: start=0, step=1, limit=1
            $region319: #{custom-call.2} parent=317 // loop_pre_header
              _
            $region320: #{custom-call.2} parent=317 // loop_header
              %s1128 = sphi 0, %s1132
              %p1129 = scmp.ge.s32.totalorder %s1128, 1
              %s1133 = sphi %s971, %s971
              %s1134 = sphi %s1119, %s1119
            $region321: #{custom-call.2} parent=317 // loop_header_branch
              %1131 = sbr.rel (%p1129) target = $region325
            $region322: #{custom-call.2} parent=317 // loop_body
              %v1135 = vld [vmem:[%s1133] sm:$0xff]
              %1136 = vst [vmem:[%s1134] sm:$0xff] %v1135
            $region323: #{custom-call.2} parent=317 // loop_footer
              %s1132 = sadd.s32 1, %s1128
            $region324: #{custom-call.2} parent=317 // loop_footer_branch
              %1127 = sbr.rel target = $region320
            $region325: #{custom-call.2} parent=317 // loop_exit
              _
          $region318: #{custom-call.2} parent=309 // pred_fallthru
            _
        $region310: #{custom-call.2} parent=155 // pred_fallthru
          _
        %1151 = vnop
        %s1152 = smul.addr %s17, 8
        %s1153 = scalar_lea.vmem %s9, %s1152
        // Predicated region
        $region341: #{custom-call.2} parent=155 // pred_check
          _
        $region342: #{custom-call.2} parent=155 // pred_check_branch
          %1155 = sbr.rel (0) target = $region344
        $region343: #{custom-call.2} parent=155 // pred_region
          // Predicated region
          $region345: #{custom-call.2} parent=343 // pred_check
            _
          $region346: #{custom-call.2} parent=343 // pred_check_branch
            %1157 = sbr.rel (0) target = $region348
          $region347: #{custom-call.2} parent=343 // pred_region
            // Predicated region
            $region360: #{custom-call.2} parent=347 // pred_check
              _
            $region361: #{custom-call.2} parent=347 // pred_check_branch
              %1172 = sbr.rel (0) target = $region363
            $region362: #{custom-call.2} parent=347 // pred_region
              loop: start=0, step=1, limit=1
              $region364: #{custom-call.2} parent=362 // loop_pre_header
                _
              $region365: #{custom-call.2} parent=362 // loop_header
                %s1174 = sphi 0, %s1178
                %p1175 = scmp.ge.s32.totalorder %s1174, 1
                %s1179 = sphi %s975, %s975
                %s1180 = sphi %s1153, %s1153
              $region366: #{custom-call.2} parent=362 // loop_header_branch
                %1177 = sbr.rel (%p1175) target = $region370
              $region367: #{custom-call.2} parent=362 // loop_body
                %v1181 = vld [vmem:[%s1179] sm:$0xff]
                %1182 = vst [vmem:[%s1180] sm:$0xff] %v1181
              $region368: #{custom-call.2} parent=362 // loop_footer
                %s1178 = sadd.s32 1, %s1174
              $region369: #{custom-call.2} parent=362 // loop_footer_branch
                %1173 = sbr.rel target = $region365
              $region370: #{custom-call.2} parent=362 // loop_exit
                _
            $region363: #{custom-call.2} parent=347 // pred_fallthru
              _
            // Predicated region
            $region371: #{custom-call.2} parent=347 // pred_check
              _
            $region372: #{custom-call.2} parent=347 // pred_check_branch
              %1184 = sbr.rel target = $region374
            $region373: #{custom-call.2} parent=347 // pred_region
              _
            $region374: #{custom-call.2} parent=347 // pred_fallthru
              _
          $region348: #{custom-call.2} parent=343 // pred_fallthru
            _
          // Predicated region
          $region349: #{custom-call.2} parent=343 // pred_check
            _
          $region350: #{custom-call.2} parent=343 // pred_check_branch
            %1159 = sbr.rel target = $region352
          $region351: #{custom-call.2} parent=343 // pred_region
            loop: start=0, step=1, limit=1
            $region353: #{custom-call.2} parent=351 // loop_pre_header
              _
            $region354: #{custom-call.2} parent=351 // loop_header
              %s1162 = sphi 0, %s1166
              %p1163 = scmp.ge.s32.totalorder %s1162, 1
              %s1167 = sphi %s975, %s975
              %s1168 = sphi %s1153, %s1153
            $region355: #{custom-call.2} parent=351 // loop_header_branch
              %1165 = sbr.rel (%p1163) target = $region359
            $region356: #{custom-call.2} parent=351 // loop_body
              %v1169 = vld [vmem:[%s1167] sm:$0xff]
              %1170 = vst [vmem:[%s1168] sm:$0xff] %v1169
            $region357: #{custom-call.2} parent=351 // loop_footer
              %s1166 = sadd.s32 1, %s1162
            $region358: #{custom-call.2} parent=351 // loop_footer_branch
              %1161 = sbr.rel target = $region354
            $region359: #{custom-call.2} parent=351 // loop_exit
              _
          $region352: #{custom-call.2} parent=343 // pred_fallthru
            _
        $region344: #{custom-call.2} parent=155 // pred_fallthru
          _
        %1185 = vnop
      $region156: #{custom-call.2} parent=5 // pred_fallthru
        _
      %p1186 = scmp.le.s32.totalorder 2, %s12
      // Predicated region
      $region375: #{custom-call.2} parent=5 // pred_check
        %p1187 = pneg %p1186
      $region376: #{custom-call.2} parent=5 // pred_check_branch
        %1189 = sbr.rel (%p1187) target = $region378
      $region377: #{custom-call.2} parent=5 // pred_region
        %s1190 = ssub.s32 %s12, 2
        // Predicated region
        $region379: #{custom-call.2} parent=377 // pred_check
          %p1191 = pneg %p43
        $region380: #{custom-call.2} parent=377 // pred_check_branch
          %1193 = sbr.rel (%p1191) target = $region382
        $region381: #{custom-call.2} parent=377 // pred_region
          %s1194 = sand.u32 %s28, 1
          %s1195 = sand.u32 %s28, 1
          %s1196 = smul.addr %s1195, 2
          %s1197 = scalar_lea.vmem [#allocation5], %s1196
        $region382: #{custom-call.2} parent=377 // pred_fallthru
          _
        // Predicated region
        $region383: #{custom-call.2} parent=377 // pred_check
          %p1198 = pneg %p71
        $region384: #{custom-call.2} parent=377 // pred_check_branch
          %1200 = sbr.rel (%p1198) target = $region386
        $region385: #{custom-call.2} parent=377 // pred_region
          %s1201 = sand.u32 %s56, 1
          %s1202 = sand.u32 %s56, 1
          %s1203 = smul.addr %s1202, 2
          %s1204 = scalar_lea.vmem [#allocation7], %s1203
        $region386: #{custom-call.2} parent=377 // pred_fallthru
          _
        %s1205 = sand.u32 %s18, 1
        %s1206 = sand.u32 %s18, 1
        %s1207 = smul.addr %s1206, 8
        %s1208 = scalar_lea.vmem [#allocation8], %s1207
        %s1209 = sand.u32 %s18, 1
        %s1210 = sand.u32 %s18, 1
        %s1211 = smul.addr %s1210, 8
        %s1212 = scalar_lea.vmem [#allocation9], %s1211
        %s1213 = sand.u32 %s18, 1
        %s1214 = sand.u32 %s18, 1
        %s1215 = smul.addr %s1214, 8
        %s1216 = scalar_lea.vmem [#allocation10], %s1215
        %s1217 = sand.u32 %s18, 1
        %s1218 = sand.u32 %s18, 1
        %s1219 = smul.addr %s1218, 8
        %s1220 = scalar_lea.vmem [#allocation11], %s1219
      $region378: #{custom-call.2} parent=5 // pred_fallthru
        _
    $region6: #{custom-call.2} parent=1 // loop_footer
      %s16 = sadd.s32 1, %s12
    $region7: #{custom-call.2} parent=1 // loop_footer_branch
      %11 = sbr.rel target = $region3
    $region8: #{custom-call.2} parent=1 // loop_exit
      _

// kernel: sapca_block_forward.2
$region0: #{sapca_block_forward.2}
  #allocation0 [shape = 'u32[]', space=smem, size = 0x4, offset = 0x4, fixed_abs, tag = 'smem constant byte address 0x4 - core index']
  #allocation1 [shape = 'u32[144,128]{1,0:T(1,128)}', space=vmem, size = 0x12000, scoped, tag = 'internal scratch']
  %s0 = inlined_call_operand.vmem [shape: f32[2,16,256], index: 0, kind: input, shape index: {}]
  %s1 = inlined_call_operand.vmem [shape: f32[16,16], index: 1, kind: input, shape index: {}]
  %s2 = inlined_call_operand.vmem [shape: f32[2,1,16,16], index: 2, kind: output, shape index: {0}]
  %s3 = inlined_call_operand.vmem [shape: f32[2,1,16,1], index: 3, kind: output, shape index: {1}]
  %4 = xla_tuple %s2, %s3
  %s5 = sld [smem:[#allocation0]]
  $region53: #{sapca_block_forward.2} parent=0
    _
  %s7 = ssub.s32 1, %s5
  %s8 = scalar_select 0, %s7, %s5
  loop: start=0, step=1, limit=4
  $region2: #{sapca_block_forward.2} parent=0 // loop_pre_header
    _
  $region3: #{sapca_block_forward.2} parent=0 // loop_header
    %s10 = sphi 0, %s14
    %p11 = scmp.ge.s32.totalorder %s10, 4
    %s17 = sphi 0, %s36
    %s18 = sphi 0, %s32
    %s19 = sphi 0, %s28
    %s20 = sphi 0, %s17
    %s21 = sphi 0, %s18
    %s22 = sphi 0, %s19
    %s23 = sphi 0, %s20
    %s24 = sphi 0, %s21
    %s25 = sphi 0, %s22
    %s43 = sphi 0, %s45
    %s46 = sphi 0, %s43
    %s47 = sphi 0, %s46
    %s63 = sphi 0, %s47
    %s67 = sphi 0, %s67
    %s69 = sphi 0, %s67
    %s70 = sphi 0, %s69
    %s84 = sphi 0, %s70
    %s92 = sphi 0, %s94
    %s95 = sphi 0, %s92
    %s96 = sphi 0, %s95
    %s112 = sphi 0, %s96
    %s120 = sphi 0, %s122
    %s123 = sphi 0, %s120
    %s124 = sphi 0, %s123
    %s140 = sphi 0, %s124
  $region4: #{sapca_block_forward.2} parent=0 // loop_header_branch
    %13 = sbr.rel (%p11) target = $region8
  $region5: #{sapca_block_forward.2} parent=0 // loop_body
    %s15 = ssub.s32 %s10, 1
    %s16 = ssub.s32 %s10, 2
    %s26 = sadd.s32 1, %s19
    %p27 = scmp.ge.s32.totalorder %s26, 1
    %s28 = scalar_select %p27, 0, %s26
    %s29 = sadd.s32 1, %s18
    %s30 = scalar_select %p27, %s29, %s18
    %p31 = scmp.ge.s32.totalorder %s30, 1
    %s32 = scalar_select %p31, 0, %s30
    %s33 = sadd.s32 1, %s17
    %s34 = scalar_select %p31, %s33, %s17
    %p35 = scmp.ge.s32.totalorder %s34, 2
    %s36 = scalar_select %p35, 0, %s34
    %s37 = sadd.s32 %s18, %s19
    %s38 = sadd.s32 %s32, %s28
    %s39 = ssub.s32 %s17, %s36
    %s40 = ssub.s32 %s37, %s38
    %s41 = sor.u32 %s39, %s40
    %p42 = scmp.eq.s32.totalorder %s41, 0
    %s44 = sadd.s32 %s43, 1
    %s45 = scalar_select %p42, %s43, %s44
    %p48 = pneg %p42
    %p49 = scmp.eq.s32.totalorder %s10, 1
    %p50 = por %p48, %p49
    %p51 = scmp.ne.s32.totalorder %s43, %s46
    %p52 = scmp.eq.s32.totalorder %s10, 0
    %p53 = por %p51, %p52
    %p54 = scmp.ne.s32.totalorder %s43, %s46
    %p55 = scmp.eq.s32.totalorder %s15, 1
    %p56 = por %p54, %p55
    %p57 = scmp.ne.s32.totalorder %s46, %s47
    %p58 = scmp.eq.s32.totalorder %s15, 0
    %p59 = por %p57, %p58
    %p60 = scmp.ne.s32.totalorder %s46, %s47
    %p61 = scmp.eq.s32.totalorder %s16, 1
    %p62 = por %p60, %p61
    %p64 = scmp.ne.s32.totalorder %s47, %s63
    %p65 = scmp.eq.s32.totalorder %s16, 0
    %p66 = por %p64, %p65
    %s68 = sadd.s32 %s67, 1
    %p71 = scmp.eq.s32.totalorder %s10, 1
    %p72 = scmp.ne.s32.totalorder %s67, %s69
    %p73 = scmp.eq.s32.totalorder %s10, 0
    %p74 = por %p72, %p73
    %p75 = scmp.ne.s32.totalorder %s67, %s69
    %p76 = scmp.eq.s32.totalorder %s15, 1
    %p77 = por %p75, %p76
    %p78 = scmp.ne.s32.totalorder %s69, %s70
    %p79 = scmp.eq.s32.totalorder %s15, 0
    %p80 = por %p78, %p79
    %p81 = scmp.ne.s32.totalorder %s69, %s70
    %p82 = scmp.eq.s32.totalorder %s16, 1
    %p83 = por %p81, %p82
    %p85 = scmp.ne.s32.totalorder %s70, %s84
    %p86 = scmp.eq.s32.totalorder %s16, 0
    %p87 = por %p85, %p86
    %s88 = ssub.s32 %s17, %s36
    %s89 = ssub.s32 %s18, %s32
    %s90 = sor.u32 %s88, %s89
    %p91 = scmp.eq.s32.totalorder %s90, 0
    %s93 = sadd.s32 %s92, 1
    %s94 = scalar_select %p91, %s92, %s93
    %p97 = pneg %p91
    %p98 = scmp.eq.s32.totalorder %s10, 1
    %p99 = por %p97, %p98
    %p100 = scmp.ne.s32.totalorder %s92, %s95
    %p101 = scmp.eq.s32.totalorder %s10, 0
    %p102 = por %p100, %p101
    %p103 = scmp.ne.s32.totalorder %s92, %s95
    %p104 = scmp.eq.s32.totalorder %s15, 1
    %p105 = por %p103, %p104
    %p106 = scmp.ne.s32.totalorder %s95, %s96
    %p107 = scmp.eq.s32.totalorder %s15, 0
    %p108 = por %p106, %p107
    %p109 = scmp.ne.s32.totalorder %s95, %s96
    %p110 = scmp.eq.s32.totalorder %s16, 1
    %p111 = por %p109, %p110
    %p113 = scmp.ne.s32.totalorder %s96, %s112
    %p114 = scmp.eq.s32.totalorder %s16, 0
    %p115 = por %p113, %p114
    %s116 = ssub.s32 %s17, %s36
    %s117 = ssub.s32 %s18, %s32
    %s118 = sor.u32 %s116, %s117
    %p119 = scmp.eq.s32.totalorder %s118, 0
    %s121 = sadd.s32 %s120, 1
    %s122 = scalar_select %p119, %s120, %s121
    %p125 = pneg %p119
    %p126 = scmp.eq.s32.totalorder %s10, 1
    %p127 = por %p125, %p126
    %p128 = scmp.ne.s32.totalorder %s120, %s123
    %p129 = scmp.eq.s32.totalorder %s10, 0
    %p130 = por %p128, %p129
    %p131 = scmp.ne.s32.totalorder %s120, %s123
    %p132 = scmp.eq.s32.totalorder %s15, 1
    %p133 = por %p131, %p132
    %p134 = scmp.ne.s32.totalorder %s123, %s124
    %p135 = scmp.eq.s32.totalorder %s15, 0
    %p136 = por %p134, %p135
    %p137 = scmp.ne.s32.totalorder %s123, %s124
    %p138 = scmp.eq.s32.totalorder %s16, 1
    %p139 = por %p137, %p138
    %p141 = scmp.ne.s32.totalorder %s124, %s140
    %p142 = scmp.eq.s32.totalorder %s16, 0
    %p143 = por %p141, %p142
    %p144 = scmp.le.s32.totalorder 1, %s10
    %p145 = scmp.lt.s32.totalorder %s10, 3
    %p146 = pnand %p144, %p145
    %p147 = pneg %p146
    // Predicated region
    $region9: #{sapca_block_forward.2} parent=5 // pred_check
      _
    $region10: #{sapca_block_forward.2} parent=5 // pred_check_branch
      %149 = sbr.rel (%p146) target = $region12
    $region11: #{sapca_block_forward.2} parent=5 // pred_region
      %s150 = ssub.s32 %s10, 1
      // Predicated region
      $region13: #{sapca_block_forward.2} parent=11 // pred_check
        %p151 = pneg %p80
      $region14: #{sapca_block_forward.2} parent=11 // pred_check_branch
        %153 = sbr.rel (%p151) target = $region16
      $region15: #{sapca_block_forward.2} parent=11 // pred_region
        _
      $region16: #{sapca_block_forward.2} parent=11 // pred_fallthru
        _
    $region12: #{sapca_block_forward.2} parent=5 // pred_fallthru
      _
    %p154 = scmp.lt.s32.totalorder %s10, 2
    // Predicated region
    $region17: #{sapca_block_forward.2} parent=5 // pred_check
      %p155 = pneg %p154
    $region18: #{sapca_block_forward.2} parent=5 // pred_check_branch
      %157 = sbr.rel (%p155) target = $region20
    $region19: #{sapca_block_forward.2} parent=5 // pred_region
      // Predicated region
      $region21: #{sapca_block_forward.2} parent=19 // pred_check
        %p158 = pneg %p53
      $region22: #{sapca_block_forward.2} parent=19 // pred_check_branch
        %160 = sbr.rel (%p158) target = $region24
      $region23: #{sapca_block_forward.2} parent=19 // pred_region
        %s161 = sadd.s32 %s18, %s19
        %s162 = smul.u32 2, %s161
        %p163 = scmp.lt.s32.totalorder %s17, 1
        %s164 = scalar_select %p163, %s17, 1
        %p165 = scmp.lt.s32.totalorder %s162, 1
        %s166 = scalar_select %p165, %s162, 1
        %s167 = smul.addr %s164, 4
        %s168 = sadd.s32 %s166, %s167
        %s169 = smul.addr %s168, 8
        %s170 = scalar_lea.vmem %s0, %s169
        %s171 = sadd.s32 %s18, %s19
        %s172 = smul.u32 2, %s171
      $region24: #{sapca_block_forward.2} parent=19 // pred_fallthru
        _
    $region20: #{sapca_block_forward.2} parent=5 // pred_fallthru
      _
    %p173 = scmp.le.s32.totalorder 1, %s10
    %p174 = scmp.lt.s32.totalorder %s10, 3
    %p175 = pnand %p173, %p174
    %p176 = pneg %p175
    // Predicated region
    $region25: #{sapca_block_forward.2} parent=5 // pred_check
      _
    $region26: #{sapca_block_forward.2} parent=5 // pred_check_branch
      %178 = sbr.rel (%p175) target = $region28
    $region27: #{sapca_block_forward.2} parent=5 // pred_region
      %s179 = ssub.s32 %s10, 1
      %s180 = sadd.s32 %s21, %s22
      %s181 = smul.u32 2, %s180
      %p182 = scmp.lt.s32.totalorder %s20, 1
      %s183 = scalar_select %p182, %s20, 1
      %p184 = scmp.lt.s32.totalorder %s181, 1
      %s185 = scalar_select %p184, %s181, 1
      %s186 = smul.addr %s183, 4
      %s187 = sadd.s32 %s185, %s186
      %s188 = smul.addr %s187, 8
      %s189 = scalar_lea.vmem %s0, %s188
      %p190 = pneg %p59
      %p191 = pneg %p56
      %p192 = pneg %p80
      %p193 = pneg %p77
      %p194 = pneg %p108
      %p195 = pneg %p105
      %p196 = scmp.lt.s32.totalorder %s20, 1
      %s197 = scalar_select %p196, %s20, 1
      %p198 = scmp.lt.s32.totalorder %s21, 0
      %s199 = scalar_select %p198, %s21, 0
      %s200 = smul.addr %s199, 2
      %s201 = smul.addr %s197, 2
      %s202 = sadd.s32 %s200, %s201
      %s203 = smul.addr %s202, 8
      %s204 = scalar_lea.vmem %s2, %s203
      %p205 = pneg %p136
      %p206 = pneg %p133
      %p207 = scmp.lt.s32.totalorder %s20, 1
      %s208 = scalar_select %p207, %s20, 1
      %p209 = scmp.lt.s32.totalorder %s21, 0
      %s210 = scalar_select %p209, %s21, 0
      %s211 = smul.addr %s210, 2
      %s212 = smul.addr %s208, 2
      %s213 = sadd.s32 %s211, %s212
      %s214 = smul.addr %s213, 8
      %s215 = scalar_lea.vmem %s3, %s214
      %s216 = sadd.s32 %s21, %s22
      %s217 = smul.u32 2, %s216
      %p218 = scmp.lt.s32.totalorder %s20, 1
      %s219 = scalar_select %p218, %s20, 1
      %p220 = scmp.lt.s32.totalorder %s217, 1
      %s221 = scalar_select %p220, %s217, 1
      %s222 = smul.addr %s219, 4
      %s223 = sadd.s32 %s221, %s222
      %s224 = smul.addr %s223, 8
      %s225 = scalar_lea.vmem %s0, %s224
      %s226 = sadd.s32 %s21, %s22
      %s227 = smul.u32 2, %s226
      %p228 = scmp.lt.s32.totalorder %s20, 1
      %s229 = scalar_select %p228, %s20, 1
      %p230 = scmp.lt.s32.totalorder %s21, 0
      %s231 = scalar_select %p230, %s21, 0
      %s232 = smul.addr %s231, 2
      %s233 = smul.addr %s229, 2
      %s234 = sadd.s32 %s232, %s233
      %s235 = smul.addr %s234, 8
      %s236 = scalar_lea.vmem %s2, %s235
      %p237 = scmp.lt.s32.totalorder %s20, 1
      %s238 = scalar_select %p237, %s20, 1
      %p239 = scmp.lt.s32.totalorder %s21, 0
      %s240 = scalar_select %p239, %s21, 0
      %s241 = smul.addr %s240, 2
      %s242 = smul.addr %s238, 2
      %s243 = sadd.s32 %s241, %s242
      %s244 = smul.addr %s243, 8
      %s245 = scalar_lea.vmem %s3, %s244
      %p246 = scmp.eq.s32.totalorder %s22, 0
      // Predicated region
      $region29: #{sapca_block_forward.2} parent=27 // pred_check
        %p247 = pneg %p246
      $region30: #{sapca_block_forward.2} parent=27 // pred_check_branch
        %249 = sbr.rel (%p247) target = $region32
      $region31: #{sapca_block_forward.2} parent=27 // pred_region
        %vm250 = vcmask 130048
        %251 = vst.msk [vmem:[%s236] sm:$0xff] %vm250, 0.0
        %252 = vst.msk [vmem:[%s236 + $0x8] sm:$0xff] %vm250, 0.0
        %vm253 = vcmask 7168
        %254 = vst.msk [vmem:[%s245] sm:$0xff] %vm253, 0.0
        %255 = vst.msk [vmem:[%s245 + $0x8] sm:$0xff] %vm253, 0.0
      $region32: #{sapca_block_forward.2} parent=27 // pred_fallthru
        _
      %v256 = vld [vmem:[%s1] sm:$0xff]
      %v257 = vld [vmem:[%s1 + $0x8] sm:$0xff]
      %v258 = vld [vmem:[%s225] sm:$0xff]
      %v259 = vld [vmem:[%s225 + $0x8] sm:$0xff]
      %v260 = vld [vmem:[%s225 + $0x10] sm:$0xff]
      %v261 = vld [vmem:[%s225 + $0x18] sm:$0xff]
      %vm262 = vcmask 130048
      %v264 = vsel %vm262, %v256, 0
      %v267 = vsel %vm262, %v257, 0
      %269 = vmatprep.subr.mxu0 %v259
      %270 = vmatpush1.msra.mxu0 %v258
      %271 = vmatprep.subr.mxu0 %v261
      %272 = vmatpush1.msra.mxu0 %v260
      %273 = vmatprep.subr.mxu0 0.0
      %274 = vmatpush1.msra.mxu0 0.0
      %275 = vmatprep.subr.mxu0 0.0
      %276 = vmatpush1.msra.mxu0 0.0
      %277 = vmatprep.subr.mxu0 0.0
      %278 = vmatpush1.msra.mxu0 0.0
      %279 = vmatprep.subr.mxu0 0.0
      %280 = vmatpush1.msra.mxu0 0.0
      %281 = vmatprep.subr.mxu0 0.0
      %282 = vmatpush1.msra.mxu0 0.0
      %283 = vmatprep.subr.mxu0 0.0
      %284 = vmatpush1.msra.mxu0 0.0
      %285 = vmatprep.subr.mxu0 0.0
      %286 = vmatpush1.msra.mxu0 0.0
      %287 = vmatprep.subr.mxu0 0.0
      %288 = vmatpush1.msra.mxu0 0.0
      %289 = vmatprep.subr.mxu0 0.0
      %290 = vmatpush1.msra.mxu0 0.0
      %291 = vmatprep.subr.mxu0 0.0
      %292 = vmatpush1.msra.mxu0 0.0
      %293 = vmatprep.subr.mxu0 0.0
      %294 = vmatpush1.msra.mxu0 0.0
      %295 = vmatprep.subr.mxu0 0.0
      %296 = vmatpush1.msra.mxu0 0.0
      %297 = vmatprep.subr.mxu0 0.0
      %298 = vmatpush1.msra.mxu0 0.0
      %299 = vmatprep.subr.mxu0 0.0
      %300 = vmatpush1.msra.mxu0 0.0
      %301 = vmatprep.subr.mxu0 0.0
      %302 = vmatpush1.msra.mxu0 0.0
      %303 = vmatprep.subr.mxu0 0.0
      %304 = vmatpush1.msra.mxu0 0.0
      %305 = vmatprep.subr.mxu0 0.0
      %306 = vmatpush1.msra.mxu0 0.0
      %307 = vmatprep.subr.mxu0 0.0
      %308 = vmatpush1.msra.mxu0 0.0
      %309 = vmatprep.subr.mxu0 0.0
      %310 = vmatpush1.msra.mxu0 0.0
      %311 = vmatprep.subr.mxu0 0.0
      %312 = vmatpush1.msra.mxu0 0.0
      %313 = vmatprep.subr.mxu0 0.0
      %314 = vmatpush1.msra.mxu0 0.0
      %315 = vmatprep.subr.mxu0 0.0
      %316 = vmatpush1.msra.mxu0 0.0
      %317 = vmatprep.subr.mxu0 0.0
      %318 = vmatpush1.msra.mxu0 0.0
      %319 = vmatprep.subr.mxu0 0.0
      %320 = vmatpush1.msra.mxu0 0.0
      %321 = vmatprep.subr.mxu0 0.0
      %322 = vmatpush1.msra.mxu0 0.0
      %323 = vmatprep.subr.mxu0 0.0
      %324 = vmatpush1.msra.mxu0 0.0
      %325 = vmatprep.subr.mxu0 0.0
      %326 = vmatpush1.msra.mxu0 0.0
      %327 = vmatprep.subr.mxu0 0.0
      %328 = vmatpush1.msra.mxu0 0.0
      %329 = vmatprep.subr.mxu0 0.0
      %330 = vmatpush1.msra.mxu0 0.0
      %331 = vmatprep.subr.mxu0 0.0
      %332 = vmatpush1.msra.mxu0 0.0
      %333 = vmatprep.mubr.f32.mxu0 0.0
      %334 = vmatmul.mubr.f32.gmra.mrb[0].mxu0 %v264
      %v335 = vpop.f32.mrb[0].mxu0
      %v336 = vadd.f32 0.0, %v335
      %v337 = vpop.f32.mrb[0].mxu0
      %v338 = vadd.f32 0.0, %v337
      %339 = vmatprep.mubr.f32.mxu0 0.0
      %340 = vmatmul.mubr.f32.gmra.mrb[0].mxu0 %v267
      %v341 = vpop.f32.mrb[0].mxu0
      %v342 = vadd.f32 0.0, %v341
      %v343 = vpop.f32.mrb[0].mxu0
      %v344 = vadd.f32 0.0, %v343
      %345 = vdwg.mxu0
      %v346 = vld [vmem:[%s236] sm:$0xff]
      %v347 = vld [vmem:[%s236 + $0x8] sm:$0xff]
      %348 = vmatprep.subr.mxu0 %v338
      %349 = vmatpush1.xpose.msra.mxu0 %v336
      %350 = vmatprep.subr.mxu0 %v344
      %351 = vmatpush1.xpose.msra.mxu0 %v342
      %352 = vmatprep.subr.mxu0 0.0
      %353 = vmatpush1.xpose.msra.mxu0 0.0
      %354 = vmatprep.subr.mxu0 0.0
      %355 = vmatpush1.xpose.msra.mxu0 0.0
      %356 = vmatprep.subr.mxu0 0.0
      %357 = vmatpush1.xpose.msra.mxu0 0.0
      %358 = vmatprep.subr.mxu0 0.0
      %359 = vmatpush1.xpose.msra.mxu0 0.0
      %360 = vmatprep.subr.mxu0 0.0
      %361 = vmatpush1.xpose.msra.mxu0 0.0
      %362 = vmatprep.subr.mxu0 0.0
      %363 = vmatpush1.xpose.msra.mxu0 0.0
      %364 = vmatprep.subr.mxu0 0.0
      %365 = vmatpush1.xpose.msra.mxu0 0.0
      %366 = vmatprep.subr.mxu0 0.0
      %367 = vmatpush1.xpose.msra.mxu0 0.0
      %368 = vmatprep.subr.mxu0 0.0
      %369 = vmatpush1.xpose.msra.mxu0 0.0
      %370 = vmatprep.subr.mxu0 0.0
      %371 = vmatpush1.xpose.msra.mxu0 0.0
      %372 = vmatprep.subr.mxu0 0.0
      %373 = vmatpush1.xpose.msra.mxu0 0.0
      %374 = vmatprep.subr.mxu0 0.0
      %375 = vmatpush1.xpose.msra.mxu0 0.0
      %376 = vmatprep.subr.mxu0 0.0
      %377 = vmatpush1.xpose.msra.mxu0 0.0
      %378 = vmatprep.subr.mxu0 0.0
      %379 = vmatpush1.xpose.msra.mxu0 0.0
      %380 = vmatprep.subr.mxu0 0.0
      %381 = vmatpush1.xpose.msra.mxu0 0.0
      %382 = vmatprep.subr.mxu0 0.0
      %383 = vmatpush1.xpose.msra.mxu0 0.0
      %384 = vmatprep.subr.mxu0 0.0
      %385 = vmatpush1.xpose.msra.mxu0 0.0
      %386 = vmatprep.subr.mxu0 0.0
      %387 = vmatpush1.xpose.msra.mxu0 0.0
      %388 = vmatprep.subr.mxu0 0.0
      %389 = vmatpush1.xpose.msra.mxu0 0.0
      %390 = vmatprep.subr.mxu0 0.0
      %391 = vmatpush1.xpose.msra.mxu0 0.0
      %392 = vmatprep.subr.mxu0 0.0
      %393 = vmatpush1.xpose.msra.mxu0 0.0
      %394 = vmatprep.subr.mxu0 0.0
      %395 = vmatpush1.xpose.msra.mxu0 0.0
      %396 = vmatprep.subr.mxu0 0.0
      %397 = vmatpush1.xpose.msra.mxu0 0.0
      %398 = vmatprep.subr.mxu0 0.0
      %399 = vmatpush1.xpose.msra.mxu0 0.0
      %400 = vmatprep.subr.mxu0 0.0
      %401 = vmatpush1.xpose.msra.mxu0 0.0
      %402 = vmatprep.subr.mxu0 0.0
      %403 = vmatpush1.xpose.msra.mxu0 0.0
      %404 = vmatprep.subr.mxu0 0.0
      %405 = vmatpush1.xpose.msra.mxu0 0.0
      %406 = vmatprep.subr.mxu0 0.0
      %407 = vmatpush1.xpose.msra.mxu0 0.0
      %408 = vmatprep.subr.mxu0 0.0
      %409 = vmatpush1.xpose.msra.mxu0 0.0
      %410 = vmatprep.subr.mxu0 0.0
      %411 = vmatpush1.xpose.msra.mxu0 0.0
      %412 = vmatprep.mubr.f32.mxu0 %v338
      %413 = vmatmul.mubr.f32.gmra.mrb[0].mxu0 %v336
      %v414 = vpop.f32.mrb[0].mxu0
      %v415 = vadd.f32 0.0, %v414
      %v416 = vpop.f32.mrb[0].mxu0
      %417 = vmatprep.mubr.f32.mxu0 %v344
      %418 = vmatmul.mubr.f32.gmra.mrb[0].mxu0 %v342
      %v419 = vpop.f32.mrb[0].mxu0
      %v420 = vadd.f32 0.0, %v419
      %v421 = vpop.f32.mrb[0].mxu0
      %422 = vdwg.mxu0
      %v423 = vadd.f32 %v346, %v415
      %v424 = vadd.f32 %v347, %v420
      %425 = vst.msk [vmem:[%s236] sm:$0xff] %vm262, %v423
      %426 = vst.msk [vmem:[%s236 + $0x8] sm:$0xff] %vm262, %v424
      %v427 = vld [vmem:[%s245] sm:$0xff]
      %v428 = vld [vmem:[%s245 + $0x8] sm:$0xff]
      %v429 = vadd.f32 %v336, %v338
      %430 = vadd.xlane.f32.xlu0 %v429
      %v431 = vpop.xlane.xlu0 %430
      %v432 = vadd.f32 %v342, %v344
      %433 = vadd.xlane.f32.xlu0 %v432
      %v434 = vpop.xlane.xlu0 %433
      %v435 = vadd.f32 %v427, %v431
      %v436 = vadd.f32 %v428, %v434
      %vm437 = vcmask 7168
      %438 = vst.msk [vmem:[%s245] sm:$0xff] %vm437, %v435
      %439 = vst.msk [vmem:[%s245 + $0x8] sm:$0xff] %vm437, %v436
      %p440 = scmp.lt.s32.totalorder %s20, 1
      %s441 = scalar_select %p440, %s20, 1
      %p442 = scmp.lt.s32.totalorder %s21, 0
      %s443 = scalar_select %p442, %s21, 0
      %s444 = smul.addr %s443, 2
      %s445 = smul.addr %s441, 2
      %s446 = sadd.s32 %s444, %s445
      %s447 = smul.addr %s446, 8
      %s448 = scalar_lea.vmem %s2, %s447
      %p449 = scmp.lt.s32.totalorder %s20, 1
      %s450 = scalar_select %p449, %s20, 1
      %p451 = scmp.lt.s32.totalorder %s21, 0
      %s452 = scalar_select %p451, %s21, 0
      %s453 = smul.addr %s452, 2
      %s454 = smul.addr %s450, 2
      %s455 = sadd.s32 %s453, %s454
      %s456 = smul.addr %s455, 8
      %s457 = scalar_lea.vmem %s3, %s456
      // Predicated region
      $region33: #{sapca_block_forward.2} parent=27 // pred_check
        %p458 = pneg %p105
      $region34: #{sapca_block_forward.2} parent=27 // pred_check_branch
        %460 = sbr.rel (%p458) target = $region36
      $region35: #{sapca_block_forward.2} parent=27 // pred_region
        _
      $region36: #{sapca_block_forward.2} parent=27 // pred_fallthru
        _
      // Predicated region
      $region37: #{sapca_block_forward.2} parent=27 // pred_check
        %p461 = pneg %p133
      $region38: #{sapca_block_forward.2} parent=27 // pred_check_branch
        %463 = sbr.rel (%p461) target = $region40
      $region39: #{sapca_block_forward.2} parent=27 // pred_region
        _
      $region40: #{sapca_block_forward.2} parent=27 // pred_fallthru
        _
    $region28: #{sapca_block_forward.2} parent=5 // pred_fallthru
      _
    %p464 = scmp.le.s32.totalorder 2, %s10
    // Predicated region
    $region41: #{sapca_block_forward.2} parent=5 // pred_check
      %p465 = pneg %p464
    $region42: #{sapca_block_forward.2} parent=5 // pred_check_branch
      %467 = sbr.rel (%p465) target = $region44
    $region43: #{sapca_block_forward.2} parent=5 // pred_region
      %s468 = ssub.s32 %s10, 2
      // Predicated region
      $region45: #{sapca_block_forward.2} parent=43 // pred_check
        %p469 = pneg %p111
      $region46: #{sapca_block_forward.2} parent=43 // pred_check_branch
        %471 = sbr.rel (%p469) target = $region48
      $region47: #{sapca_block_forward.2} parent=43 // pred_region
        %p472 = scmp.lt.s32.totalorder %s23, 1
        %s473 = scalar_select %p472, %s23, 1
        %p474 = scmp.lt.s32.totalorder %s24, 0
        %s475 = scalar_select %p474, %s24, 0
        %s476 = smul.addr %s475, 2
        %s477 = smul.addr %s473, 2
        %s478 = sadd.s32 %s476, %s477
        %s479 = smul.addr %s478, 8
        %s480 = scalar_lea.vmem %s2, %s479
      $region48: #{sapca_block_forward.2} parent=43 // pred_fallthru
        _
      // Predicated region
      $region49: #{sapca_block_forward.2} parent=43 // pred_check
        %p481 = pneg %p139
      $region50: #{sapca_block_forward.2} parent=43 // pred_check_branch
        %483 = sbr.rel (%p481) target = $region52
      $region51: #{sapca_block_forward.2} parent=43 // pred_region
        %p484 = scmp.lt.s32.totalorder %s23, 1
        %s485 = scalar_select %p484, %s23, 1
        %p486 = scmp.lt.s32.totalorder %s24, 0
        %s487 = scalar_select %p486, %s24, 0
        %s488 = smul.addr %s487, 2
        %s489 = smul.addr %s485, 2
        %s490 = sadd.s32 %s488, %s489
        %s491 = smul.addr %s490, 8
        %s492 = scalar_lea.vmem %s3, %s491
      $region52: #{sapca_block_forward.2} parent=43 // pred_fallthru
        _
    $region44: #{sapca_block_forward.2} parent=5 // pred_fallthru
      _
  $region6: #{sapca_block_forward.2} parent=0 // loop_footer
    %s14 = sadd.s32 1, %s10
  $region7: #{sapca_block_forward.2} parent=0 // loop_footer_branch
    %9 = sbr.rel target = $region3
  $region8: #{sapca_block_forward.2} parent=0 // loop_exit
    _

// kernel: sapca_block_forward.3
$region0: #{sapca_block_forward.3}
  #allocation0 [shape = 'u32[]', space=smem, size = 0x4, offset = 0x4, fixed_abs, tag = 'smem constant byte address 0x4 - core index']
  #allocation1 [shape = 'u32[144,128]{1,0:T(1,128)}', space=vmem, size = 0x12000, scoped, tag = 'internal scratch']
  %s0 = inlined_call_operand.vmem [shape: f32[2,16,256], index: 0, kind: input, shape index: {}]
  %s1 = inlined_call_operand.vmem [shape: f32[2,16,16], index: 1, kind: input, shape index: {}]
  %s2 = inlined_call_operand.vmem [shape: f32[2,16,1], index: 2, kind: input, shape index: {}]
  %s3 = inlined_call_operand.vmem [shape: f32[2,16,256], index: 3, kind: output, shape index: {}]
  %s4 = sld [smem:[#allocation0]]
  $region45: #{sapca_block_forward.3} parent=0
    _
  %s6 = ssub.s32 1, %s4
  %s7 = scalar_select 0, %s6, %s4
  loop: start=0, step=1, limit=4
  $region2: #{sapca_block_forward.3} parent=0 // loop_pre_header
    _
  $region3: #{sapca_block_forward.3} parent=0 // loop_header
    %s9 = sphi 0, %s13
    %p10 = scmp.ge.s32.totalorder %s9, 4
    %s16 = sphi 0, %s28
    %s17 = sphi 0, %s24
    %s18 = sphi 0, %s16
    %s19 = sphi 0, %s17
    %s20 = sphi 0, %s18
    %s21 = sphi 0, %s19
    %s33 = sphi 0, %s35
    %s36 = sphi 0, %s33
    %s37 = sphi 0, %s36
    %s53 = sphi 0, %s37
    %s59 = sphi 0, %s61
    %s62 = sphi 0, %s59
    %s63 = sphi 0, %s62
    %s79 = sphi 0, %s63
    %s85 = sphi 0, %s87
    %s88 = sphi 0, %s85
    %s89 = sphi 0, %s88
    %s105 = sphi 0, %s89
    %s113 = sphi 0, %s115
    %s116 = sphi 0, %s113
    %s117 = sphi 0, %s116
    %s133 = sphi 0, %s117
  $region4: #{sapca_block_forward.3} parent=0 // loop_header_branch
    %12 = sbr.rel (%p10) target = $region8
  $region5: #{sapca_block_forward.3} parent=0 // loop_body
    %s14 = ssub.s32 %s9, 1
    %s15 = ssub.s32 %s9, 2
    %s22 = sadd.s32 1, %s17
    %p23 = scmp.ge.s32.totalorder %s22, 1
    %s24 = scalar_select %p23, 0, %s22
    %s25 = sadd.s32 1, %s16
    %s26 = scalar_select %p23, %s25, %s16
    %p27 = scmp.ge.s32.totalorder %s26, 2
    %s28 = scalar_select %p27, 0, %s26
    %s29 = ssub.s32 %s16, %s28
    %s30 = ssub.s32 %s17, %s24
    %s31 = sor.u32 %s29, %s30
    %p32 = scmp.eq.s32.totalorder %s31, 0
    %s34 = sadd.s32 %s33, 1
    %s35 = scalar_select %p32, %s33, %s34
    %p38 = pneg %p32
    %p39 = scmp.eq.s32.totalorder %s9, 1
    %p40 = por %p38, %p39
    %p41 = scmp.ne.s32.totalorder %s33, %s36
    %p42 = scmp.eq.s32.totalorder %s9, 0
    %p43 = por %p41, %p42
    %p44 = scmp.ne.s32.totalorder %s33, %s36
    %p45 = scmp.eq.s32.totalorder %s14, 1
    %p46 = por %p44, %p45
    %p47 = scmp.ne.s32.totalorder %s36, %s37
    %p48 = scmp.eq.s32.totalorder %s14, 0
    %p49 = por %p47, %p48
    %p50 = scmp.ne.s32.totalorder %s36, %s37
    %p51 = scmp.eq.s32.totalorder %s15, 1
    %p52 = por %p50, %p51
    %p54 = scmp.ne.s32.totalorder %s37, %s53
    %p55 = scmp.eq.s32.totalorder %s15, 0
    %p56 = por %p54, %p55
    %s57 = ssub.s32 %s16, %s28
    %p58 = scmp.eq.s32.totalorder %s57, 0
    %s60 = sadd.s32 %s59, 1
    %s61 = scalar_select %p58, %s59, %s60
    %p64 = pneg %p58
    %p65 = scmp.eq.s32.totalorder %s9, 1
    %p66 = por %p64, %p65
    %p67 = scmp.ne.s32.totalorder %s59, %s62
    %p68 = scmp.eq.s32.totalorder %s9, 0
    %p69 = por %p67, %p68
    %p70 = scmp.ne.s32.totalorder %s59, %s62
    %p71 = scmp.eq.s32.totalorder %s14, 1
    %p72 = por %p70, %p71
    %p73 = scmp.ne.s32.totalorder %s62, %s63
    %p74 = scmp.eq.s32.totalorder %s14, 0
    %p75 = por %p73, %p74
    %p76 = scmp.ne.s32.totalorder %s62, %s63
    %p77 = scmp.eq.s32.totalorder %s15, 1
    %p78 = por %p76, %p77
    %p80 = scmp.ne.s32.totalorder %s63, %s79
    %p81 = scmp.eq.s32.totalorder %s15, 0
    %p82 = por %p80, %p81
    %s83 = ssub.s32 %s16, %s28
    %p84 = scmp.eq.s32.totalorder %s83, 0
    %s86 = sadd.s32 %s85, 1
    %s87 = scalar_select %p84, %s85, %s86
    %p90 = pneg %p84
    %p91 = scmp.eq.s32.totalorder %s9, 1
    %p92 = por %p90, %p91
    %p93 = scmp.ne.s32.totalorder %s85, %s88
    %p94 = scmp.eq.s32.totalorder %s9, 0
    %p95 = por %p93, %p94
    %p96 = scmp.ne.s32.totalorder %s85, %s88
    %p97 = scmp.eq.s32.totalorder %s14, 1
    %p98 = por %p96, %p97
    %p99 = scmp.ne.s32.totalorder %s88, %s89
    %p100 = scmp.eq.s32.totalorder %s14, 0
    %p101 = por %p99, %p100
    %p102 = scmp.ne.s32.totalorder %s88, %s89
    %p103 = scmp.eq.s32.totalorder %s15, 1
    %p104 = por %p102, %p103
    %p106 = scmp.ne.s32.totalorder %s89, %s105
    %p107 = scmp.eq.s32.totalorder %s15, 0
    %p108 = por %p106, %p107
    %s109 = ssub.s32 %s16, %s28
    %s110 = ssub.s32 %s17, %s24
    %s111 = sor.u32 %s109, %s110
    %p112 = scmp.eq.s32.totalorder %s111, 0
    %s114 = sadd.s32 %s113, 1
    %s115 = scalar_select %p112, %s113, %s114
    %p118 = pneg %p112
    %p119 = scmp.eq.s32.totalorder %s9, 1
    %p120 = por %p118, %p119
    %p121 = scmp.ne.s32.totalorder %s113, %s116
    %p122 = scmp.eq.s32.totalorder %s9, 0
    %p123 = por %p121, %p122
    %p124 = scmp.ne.s32.totalorder %s113, %s116
    %p125 = scmp.eq.s32.totalorder %s14, 1
    %p126 = por %p124, %p125
    %p127 = scmp.ne.s32.totalorder %s116, %s117
    %p128 = scmp.eq.s32.totalorder %s14, 0
    %p129 = por %p127, %p128
    %p130 = scmp.ne.s32.totalorder %s116, %s117
    %p131 = scmp.eq.s32.totalorder %s15, 1
    %p132 = por %p130, %p131
    %p134 = scmp.ne.s32.totalorder %s117, %s133
    %p135 = scmp.eq.s32.totalorder %s15, 0
    %p136 = por %p134, %p135
    %p137 = scmp.le.s32.totalorder 1, %s9
    %p138 = scmp.lt.s32.totalorder %s9, 3
    %p139 = pnand %p137, %p138
    %p140 = pneg %p139
    // Predicated region
    $region9: #{sapca_block_forward.3} parent=5 // pred_check
      _
    $region10: #{sapca_block_forward.3} parent=5 // pred_check_branch
      %142 = sbr.rel (%p139) target = $region12
    $region11: #{sapca_block_forward.3} parent=5 // pred_region
      %s143 = ssub.s32 %s9, 1
    $region12: #{sapca_block_forward.3} parent=5 // pred_fallthru
      _
    %p144 = scmp.lt.s32.totalorder %s9, 2
    // Predicated region
    $region13: #{sapca_block_forward.3} parent=5 // pred_check
      %p145 = pneg %p144
    $region14: #{sapca_block_forward.3} parent=5 // pred_check_branch
      %147 = sbr.rel (%p145) target = $region16
    $region15: #{sapca_block_forward.3} parent=5 // pred_region
      // Predicated region
      $region17: #{sapca_block_forward.3} parent=15 // pred_check
        %p148 = pneg %p43
      $region18: #{sapca_block_forward.3} parent=15 // pred_check_branch
        %150 = sbr.rel (%p148) target = $region20
      $region19: #{sapca_block_forward.3} parent=15 // pred_region
        %s151 = smul.u32 2, %s17
        %p152 = scmp.lt.s32.totalorder %s16, 1
        %s153 = scalar_select %p152, %s16, 1
        %p154 = scmp.lt.s32.totalorder %s151, 1
        %s155 = scalar_select %p154, %s151, 1
        %s156 = smul.addr %s153, 4
        %s157 = sadd.s32 %s155, %s156
        %s158 = smul.addr %s157, 8
        %s159 = scalar_lea.vmem %s0, %s158
        %s160 = smul.u32 2, %s17
      $region20: #{sapca_block_forward.3} parent=15 // pred_fallthru
        _
      // Predicated region
      $region21: #{sapca_block_forward.3} parent=15 // pred_check
        %p161 = pneg %p69
      $region22: #{sapca_block_forward.3} parent=15 // pred_check_branch
        %163 = sbr.rel (%p161) target = $region24
      $region23: #{sapca_block_forward.3} parent=15 // pred_region
        %p164 = scmp.lt.s32.totalorder %s16, 1
        %s165 = scalar_select %p164, %s16, 1
        %s166 = smul.addr %s165, 2
        %s167 = smul.addr %s166, 8
        %s168 = scalar_lea.vmem %s1, %s167
      $region24: #{sapca_block_forward.3} parent=15 // pred_fallthru
        _
      // Predicated region
      $region25: #{sapca_block_forward.3} parent=15 // pred_check
        %p169 = pneg %p95
      $region26: #{sapca_block_forward.3} parent=15 // pred_check_branch
        %171 = sbr.rel (%p169) target = $region28
      $region27: #{sapca_block_forward.3} parent=15 // pred_region
        %p172 = scmp.lt.s32.totalorder %s16, 1
        %s173 = scalar_select %p172, %s16, 1
        %s174 = smul.addr %s173, 2
        %s175 = smul.addr %s174, 8
        %s176 = scalar_lea.vmem %s2, %s175
      $region28: #{sapca_block_forward.3} parent=15 // pred_fallthru
        _
    $region16: #{sapca_block_forward.3} parent=5 // pred_fallthru
      _
    %p177 = scmp.le.s32.totalorder 1, %s9
    %p178 = scmp.lt.s32.totalorder %s9, 3
    %p179 = pnand %p177, %p178
    %p180 = pneg %p179
    // Predicated region
    $region29: #{sapca_block_forward.3} parent=5 // pred_check
      _
    $region30: #{sapca_block_forward.3} parent=5 // pred_check_branch
      %182 = sbr.rel (%p179) target = $region32
    $region31: #{sapca_block_forward.3} parent=5 // pred_region
      %s183 = ssub.s32 %s9, 1
      %s184 = smul.u32 2, %s19
      %p185 = scmp.lt.s32.totalorder %s18, 1
      %s186 = scalar_select %p185, %s18, 1
      %p187 = scmp.lt.s32.totalorder %s184, 1
      %s188 = scalar_select %p187, %s184, 1
      %s189 = smul.addr %s186, 4
      %s190 = sadd.s32 %s188, %s189
      %s191 = smul.addr %s190, 8
      %s192 = scalar_lea.vmem %s0, %s191
      %p193 = pneg %p49
      %p194 = pneg %p46
      %p195 = scmp.lt.s32.totalorder %s18, 1
      %s196 = scalar_select %p195, %s18, 1
      %s197 = smul.addr %s196, 2
      %s198 = smul.addr %s197, 8
      %s199 = scalar_lea.vmem %s1, %s198
      %p200 = pneg %p75
      %p201 = pneg %p72
      %p202 = scmp.lt.s32.totalorder %s18, 1
      %s203 = scalar_select %p202, %s18, 1
      %s204 = smul.addr %s203, 2
      %s205 = smul.addr %s204, 8
      %s206 = scalar_lea.vmem %s2, %s205
      %p207 = pneg %p101
      %p208 = pneg %p98
      %p209 = pneg %p129
      %p210 = pneg %p126
      %s211 = smul.u32 2, %s19
      %p212 = scmp.lt.s32.totalorder %s18, 1
      %s213 = scalar_select %p212, %s18, 1
      %p214 = scmp.lt.s32.totalorder %s211, 1
      %s215 = scalar_select %p214, %s211, 1
      %s216 = smul.addr %s213, 4
      %s217 = sadd.s32 %s215, %s216
      %s218 = smul.addr %s217, 8
      %s219 = scalar_lea.vmem %s3, %s218
      %s220 = smul.u32 2, %s19
      %p221 = scmp.lt.s32.totalorder %s18, 1
      %s222 = scalar_select %p221, %s18, 1
      %p223 = scmp.lt.s32.totalorder %s220, 1
      %s224 = scalar_select %p223, %s220, 1
      %s225 = smul.addr %s222, 4
      %s226 = sadd.s32 %s224, %s225
      %s227 = smul.addr %s226, 8
      %s228 = scalar_lea.vmem %s0, %s227
      %s229 = smul.u32 2, %s19
      %p230 = scmp.lt.s32.totalorder %s18, 1
      %s231 = scalar_select %p230, %s18, 1
      %s232 = smul.addr %s231, 2
      %s233 = smul.addr %s232, 8
      %s234 = scalar_lea.vmem %s1, %s233
      %p235 = scmp.lt.s32.totalorder %s18, 1
      %s236 = scalar_select %p235, %s18, 1
      %s237 = smul.addr %s236, 2
      %s238 = smul.addr %s237, 8
      %s239 = scalar_lea.vmem %s2, %s238
      %s240 = smul.u32 2, %s19
      %p241 = scmp.lt.s32.totalorder %s18, 1
      %s242 = scalar_select %p241, %s18, 1
      %p243 = scmp.lt.s32.totalorder %s240, 1
      %s244 = scalar_select %p243, %s240, 1
      %s245 = smul.addr %s242, 4
      %s246 = sadd.s32 %s244, %s245
      %s247 = smul.addr %s246, 8
      %s248 = scalar_lea.vmem %s3, %s247
      %s249 = smul.u32 2, %s19
      %v250 = vld [vmem:[%s228] sm:$0xff]
      %v251 = vld [vmem:[%s228 + $0x8] sm:$0xff]
      %v252 = vld [vmem:[%s228 + $0x10] sm:$0xff]
      %v253 = vld [vmem:[%s228 + $0x18] sm:$0xff]
      %v254 = vld [vmem:[%s234] sm:$0xff]
      %v255 = vld [vmem:[%s234 + $0x8] sm:$0xff]
      %vm256 = vcmask 130048
      %v258 = vsel %vm256, %v254, 0
      %v261 = vsel %vm256, %v255, 0
      %263 = vmatprep.subr.mxu0 %v251
      %264 = vmatpush1.msra.mxu0 %v250
      %265 = vmatprep.subr.mxu0 %v253
      %266 = vmatpush1.msra.mxu0 %v252
      %267 = vmatprep.subr.mxu0 0.0
      %268 = vmatpush1.msra.mxu0 0.0
      %269 = vmatprep.subr.mxu0 0.0
      %270 = vmatpush1.msra.mxu0 0.0
      %271 = vmatprep.subr.mxu0 0.0
      %272 = vmatpush1.msra.mxu0 0.0
      %273 = vmatprep.subr.mxu0 0.0
      %274 = vmatpush1.msra.mxu0 0.0
      %275 = vmatprep.subr.mxu0 0.0
      %276 = vmatpush1.msra.mxu0 0.0
      %277 = vmatprep.subr.mxu0 0.0
      %278 = vmatpush1.msra.mxu0 0.0
      %279 = vmatprep.subr.mxu0 0.0
      %280 = vmatpush1.msra.mxu0 0.0
      %281 = vmatprep.subr.mxu0 0.0
      %282 = vmatpush1.msra.mxu0 0.0
      %283 = vmatprep.subr.mxu0 0.0
      %284 = vmatpush1.msra.mxu0 0.0
      %285 = vmatprep.subr.mxu0 0.0
      %286 = vmatpush1.msra.mxu0 0.0
      %287 = vmatprep.subr.mxu0 0.0
      %288 = vmatpush1.msra.mxu0 0.0
      %289 = vmatprep.subr.mxu0 0.0
      %290 = vmatpush1.msra.mxu0 0.0
      %291 = vmatprep.subr.mxu0 0.0
      %292 = vmatpush1.msra.mxu0 0.0
      %293 = vmatprep.subr.mxu0 0.0
      %294 = vmatpush1.msra.mxu0 0.0
      %295 = vmatprep.subr.mxu0 0.0
      %296 = vmatpush1.msra.mxu0 0.0
      %297 = vmatprep.subr.mxu0 0.0
      %298 = vmatpush1.msra.mxu0 0.0
      %299 = vmatprep.subr.mxu0 0.0
      %300 = vmatpush1.msra.mxu0 0.0
      %301 = vmatprep.subr.mxu0 0.0
      %302 = vmatpush1.msra.mxu0 0.0
      %303 = vmatprep.subr.mxu0 0.0
      %304 = vmatpush1.msra.mxu0 0.0
      %305 = vmatprep.subr.mxu0 0.0
      %306 = vmatpush1.msra.mxu0 0.0
      %307 = vmatprep.subr.mxu0 0.0
      %308 = vmatpush1.msra.mxu0 0.0
      %309 = vmatprep.subr.mxu0 0.0
      %310 = vmatpush1.msra.mxu0 0.0
      %311 = vmatprep.subr.mxu0 0.0
      %312 = vmatpush1.msra.mxu0 0.0
      %313 = vmatprep.subr.mxu0 0.0
      %314 = vmatpush1.msra.mxu0 0.0
      %315 = vmatprep.subr.mxu0 0.0
      %316 = vmatpush1.msra.mxu0 0.0
      %317 = vmatprep.subr.mxu0 0.0
      %318 = vmatpush1.msra.mxu0 0.0
      %319 = vmatprep.subr.mxu0 0.0
      %320 = vmatpush1.msra.mxu0 0.0
      %321 = vmatprep.subr.mxu0 0.0
      %322 = vmatpush1.msra.mxu0 0.0
      %323 = vmatprep.subr.mxu0 0.0
      %324 = vmatpush1.msra.mxu0 0.0
      %325 = vmatprep.subr.mxu0 0.0
      %326 = vmatpush1.msra.mxu0 0.0
      %327 = vmatprep.mubr.f32.mxu0 0.0
      %328 = vmatmul.mubr.f32.gmra.mrb[0].mxu0 %v258
      %v329 = vpop.f32.mrb[0].mxu0
      %v330 = vadd.f32 0.0, %v329
      %v331 = vpop.f32.mrb[0].mxu0
      %v332 = vadd.f32 0.0, %v331
      %333 = vmatprep.mubr.f32.mxu0 0.0
      %334 = vmatmul.mubr.f32.gmra.mrb[0].mxu0 %v261
      %v335 = vpop.f32.mrb[0].mxu0
      %v336 = vadd.f32 0.0, %v335
      %v337 = vpop.f32.mrb[0].mxu0
      %v338 = vadd.f32 0.0, %v337
      %339 = vdwg.mxu0
      %v340 = vadd.f32 %v250, %v330
      %v341 = vadd.f32 %v251, %v332
      %v342 = vadd.f32 %v252, %v336
      %v343 = vadd.f32 %v253, %v338
      %v344 = vld [vmem:[%s239] sm:$0xff]
      %v345 = vld [vmem:[%s239 + $0x8] sm:$0xff]
      %347 = vset.pattern.permute.xlu0 0
      %348 = vperm.xlu0 %347, %v344
      %v349 = vpop.permute.xlu0 %348
      %352 = vset.pattern.permute.xlu0 0
      %353 = vperm.xlu0 %352, %v345
      %v354 = vpop.permute.xlu0 %353
      %v356 = vadd.f32 %v340, %v349
      %v357 = vadd.f32 %v341, %v349
      %v358 = vadd.f32 %v342, %v354
      %v359 = vadd.f32 %v343, %v354
      %360 = vst [vmem:[%s248] sm:$0xff] %v356
      %361 = vst [vmem:[%s248 + $0x8] sm:$0xff] %v357
      %362 = vst [vmem:[%s248 + $0x10] sm:$0xff] %v358
      %363 = vst [vmem:[%s248 + $0x18] sm:$0xff] %v359
      %s364 = smul.u32 2, %s19
      %p365 = scmp.lt.s32.totalorder %s18, 1
      %s366 = scalar_select %p365, %s18, 1
      %p367 = scmp.lt.s32.totalorder %s364, 1
      %s368 = scalar_select %p367, %s364, 1
      %s369 = smul.addr %s366, 4
      %s370 = sadd.s32 %s368, %s369
      %s371 = smul.addr %s370, 8
      %s372 = scalar_lea.vmem %s3, %s371
      // Predicated region
      $region33: #{sapca_block_forward.3} parent=31 // pred_check
        %p373 = pneg %p126
      $region34: #{sapca_block_forward.3} parent=31 // pred_check_branch
        %375 = sbr.rel (%p373) target = $region36
      $region35: #{sapca_block_forward.3} parent=31 // pred_region
        %s376 = smul.u32 2, %s19
      $region36: #{sapca_block_forward.3} parent=31 // pred_fallthru
        _
    $region32: #{sapca_block_forward.3} parent=5 // pred_fallthru
      _
    %p377 = scmp.le.s32.totalorder 2, %s9
    // Predicated region
    $region37: #{sapca_block_forward.3} parent=5 // pred_check
      %p378 = pneg %p377
    $region38: #{sapca_block_forward.3} parent=5 // pred_check_branch
      %380 = sbr.rel (%p378) target = $region40
    $region39: #{sapca_block_forward.3} parent=5 // pred_region
      %s381 = ssub.s32 %s9, 2
      // Predicated region
      $region41: #{sapca_block_forward.3} parent=39 // pred_check
        %p382 = pneg %p132
      $region42: #{sapca_block_forward.3} parent=39 // pred_check_branch
        %384 = sbr.rel (%p382) target = $region44
      $region43: #{sapca_block_forward.3} parent=39 // pred_region
        %s385 = smul.u32 2, %s21
        %p386 = scmp.lt.s32.totalorder %s20, 1
        %s387 = scalar_select %p386, %s20, 1
        %p388 = scmp.lt.s32.totalorder %s385, 1
        %s389 = scalar_select %p388, %s385, 1
        %s390 = smul.addr %s387, 4
        %s391 = sadd.s32 %s389, %s390
        %s392 = smul.addr %s391, 8
        %s393 = scalar_lea.vmem %s3, %s392
      $region44: #{sapca_block_forward.3} parent=39 // pred_fallthru
        _
    $region40: #{sapca_block_forward.3} parent=5 // pred_fallthru
      _
  $region6: #{sapca_block_forward.3} parent=0 // loop_footer
    %s13 = sadd.s32 1, %s9
  $region7: #{sapca_block_forward.3} parent=0 // loop_footer_branch
    %8 = sbr.rel target = $region3
  $region8: #{sapca_block_forward.3} parent=0 // loop_exit
    _

</llo_original>
